<compile_context>
chip_gen: v7x
topology: tpu7x:2x2x1
jax: 0.10.0
libtpu: 0.0.40
codegen_flags: <defaults>
</compile_context>

<pallas_src>
import numpy as np
import jax
import jax.numpy as jnp
from jax.experimental import pallas as pl
from jax.experimental.pallas import tpu as pltpu


def get_frequency_modes(seq_len, modes=64, mode_select_method='random'):
    """Same mode selection as the PyTorch module (numpy, deterministic after np.random.seed)."""
    modes = min(modes, seq_len // 2)
    if mode_select_method == 'random':
        index = list(range(0, seq_len // 2))
        np.random.shuffle(index)
        index = index[:modes]
    else:
        index = list(range(0, modes))
    index.sort()
    return index


def make_dft_bases(index, L, Lp):
    """Concatenated forward / inverse real-DFT bases (float32).

    Forward basis (L, 2M): rfft real/imag parts at the SELECTED modes `index`.
    Inverse basis (2M, Lp): irfft basis at OUTPUT bins 0..M-1 (the module writes
    out_ft[..., wi], i.e. consecutive low bins), lane-padded to Lp with zeros.
    """
    M = len(index)
    t = jnp.arange(L, dtype=jnp.float32)
    sel = jnp.asarray(index, dtype=jnp.float32)
    th_f = (2.0 * jnp.pi / float(L)) * t[:, None] * sel[None, :]          # (L, M)
    fwd = jnp.concatenate([jnp.cos(th_f), -jnp.sin(th_f)], axis=1)        # (L, 2M)

    kbin = jnp.arange(M, dtype=jnp.float32)                               # output bins 0..M-1
    tp = jnp.arange(Lp, dtype=jnp.float32)
    th_i = (2.0 * jnp.pi / float(L)) * kbin[:, None] * tp[None, :]        # (M, Lp)
    # irfft weighting: DC counts once (its imag is ignored -> sin row 0 is exactly 0),
    # interior bins count twice; Nyquist can never be an output bin since M <= L//2.
    amp = (jnp.where(jnp.arange(M) == 0, 1.0, 2.0) / float(L)).astype(jnp.float32)
    valid = (tp < L).astype(jnp.float32)[None, :]                         # zero the lane padding
    icos = amp[:, None] * jnp.cos(th_i) * valid
    isin = -amp[:, None] * jnp.sin(th_i) * valid
    inv = jnp.concatenate([icos, isin], axis=0)                           # (2M, Lp)
    return fwd, inv


def fourier_block_kernel(x_ref, w_ref, fwd_ref, inv_ref, o_ref, y_ref):
    _, E, Eo, M = w_ref.shape          # packed weights: (2, E, Eo, M)
    bE, _L = x_ref.shape               # x block: (b_block*E, L)
    b = bE // E
    hp = jax.lax.Precision.HIGHEST

    # forward DFT at the selected modes: one MXU matmul, 2M-wide output lanes
    xf = jnp.dot(x_ref[...], fwd_ref[...],
                 preferred_element_type=jnp.float32, precision=hp)        # (b*E, 2M)

    wre = w_ref[0]                     # (E, Eo, M)
    wim = w_ref[1]
    w_diff = wim - wre                 # hoisted Karatsuba weight combos (once per grid step)
    w_sum = wre + wim

    # per-mode complex channel mixing, contracted over E, 3 multiplies per complex product.
    # Static unroll over the (small) per-block batch; Y is assembled in a VMEM scratch so the
    # inverse transform is a single row-dense matmul.
    for bi in range(b):
        xre = xf[bi * E:(bi + 1) * E, 0:M]            # (E, M)
        xim = xf[bi * E:(bi + 1) * E, M:2 * M]        # (E, M)
        k1 = wre * (xre + xim)[:, None, :]            # (E, Eo, M)
        k2 = w_diff * xre[:, None, :]
        k3 = w_sum * xim[:, None, :]
        y_ref[bi * Eo:(bi + 1) * Eo, 0:M] = jnp.sum(k1 - k3, axis=0)        # Yre (Eo, M)
        y_ref[bi * Eo:(bi + 1) * Eo, M:2 * M] = jnp.sum(k1 + k2, axis=0)    # Yim (Eo, M)

    # inverse real DFT back to the (lane-padded) time domain: one MXU matmul over 2M
    o_ref[...] = jnp.dot(y_ref[...], inv_ref[...],
                         preferred_element_type=jnp.float32, precision=hp)  # (b*Eo, Lp)


def _pick_b_block(B, E, Eo, L, Lp, M, budget_bytes=24 << 20):
    """Largest divisor of B whose per-grid-step VMEM footprint fits a conservative budget
    (sized for v7x's smaller scoped VMEM; v5e/v6e have plenty of headroom)."""
    def est(b):
        return 4 * (2 * b * E * L             # input block, double buffered
                    + 2 * b * Eo * Lp         # output block, double buffered
                    + 2 * 2 * E * Eo * M      # packed weights, double buffered
                    + 2 * 2 * M * (L + Lp)    # bases, double buffered
                    + b * Eo * 2 * M          # Y scratch
                    + b * E * 2 * M           # xf
                    + 5 * E * Eo * M)         # live mixing temporaries per unrolled step
    divisors = [d for d in range(B, 0, -1) if B % d == 0]
    # block second-to-last dims must be sublane-aligned unless they span the full array
    valid = [d for d in divisors if d == B or ((d * E) % 8 == 0 and (d * Eo) % 8 == 0)]
    for d in valid:
        if est(d) <= budget_bytes:
            return d
    return valid[-1]


def fourier_block_forward(q, k, v, mask, wre, wim, index, *, b_block=None):
    """Pallas implementation of FourierBlock.forward. Returns (x, None) like PyTorch,
    with x in the module's (B, H, E_out, L) layout."""
    del k, v, mask  # unused by the module's forward
    B, L, H, E = q.shape
    Hw, Ew, Eo, M = wre.shape
    assert Hw == H and Ew == E and M == len(index)

    Lp = ((L + 127) // 128) * 128                       # lane-dense output length
    if b_block is None:
        b_block = _pick_b_block(B, E, Eo, L, Lp, M)
    assert B % b_block == 0
    nb = B // b_block

    # ---- glue (plain XLA outside the kernel): layout prep ----
    x = jnp.transpose(q, (2, 0, 3, 1)).reshape(H, B * E, L).astype(jnp.float32)   # (H, B*E, L)
    w = jnp.stack([wre, wim], axis=1).astype(jnp.float32)                          # (H, 2, E, Eo, M)
    fwd, inv = make_dft_bases(index, L, Lp)                                        # (L, 2M), (2M, Lp)

    out = pl.pallas_call(
        fourier_block_kernel,
        out_shape=jax.ShapeDtypeStruct((H, B * Eo, Lp), jnp.float32),
        grid=(H, nb),                                                    # batch innermost -> per-head
        in_specs=[                                                       #  weights DMA'd once per head
            pl.BlockSpec((None, b_block * E, L), lambda h, b: (h, b, 0)),          # x rows
            pl.BlockSpec((None, 2, E, Eo, M), lambda h, b: (h, 0, 0, 0, 0)),       # packed weights
            pl.BlockSpec((L, 2 * M), lambda h, b: (0, 0)),                         # forward basis
            pl.BlockSpec((2 * M, Lp), lambda h, b: (0, 0)),                        # inverse basis
        ],
        out_specs=pl.BlockSpec((None, b_block * Eo, Lp), lambda h, b: (h, b, 0)),
        scratch_shapes=[pltpu.VMEM((b_block * Eo, 2 * M), jnp.float32)],
        compiler_params=pltpu.CompilerParams(
            dimension_semantics=("parallel", "parallel")),
    )(x, w, fwd, inv)

    out = out[:, :, :L]                                         # drop lane padding
    out = out.reshape(H, B, Eo, L).transpose(1, 0, 2, 3)         # (B, H, Eo, L)
    return out, None


def reference_forward(q, wre, wim, index):
    """Pure-JAX reference mirroring the PyTorch forward verbatim (uses jnp.fft)."""
    B, L, H, E = q.shape
    Eo = wre.shape[2]
    x = jnp.transpose(q, (0, 2, 3, 1))                 # (B, H, E, L)
    x_ft = jnp.fft.rfft(x, axis=-1)                    # (B, H, E, L//2+1)
    w = wre.astype(jnp.complex64) + 1j * wim.astype(jnp.complex64)
    out_ft = jnp.zeros((B, H, Eo, L // 2 + 1), dtype=jnp.complex64)
    for wi, i in enumerate(index):
        val = jnp.einsum('bhi,hio->bho', x_ft[:, :, :, i], w[:, :, :, wi])
        out_ft = out_ft.at[:, :, :, wi].set(val)       # note: written at bin wi, not index[wi]
    return jnp.fft.irfft(out_ft, n=L, axis=-1)         # (B, H, Eo, L)


if __name__ == "__main__":
    # Small shapes consistent with the module: q is (B, L, H, E) with H == 8
    # (the weights' leading dim is hard-coded to 8) and E == in_channels // 8.
    np.random.seed(0)                     # deterministic 'random' mode selection
    B, L, H = 2, 16, 8
    in_channels = out_channels = 32
    E = in_channels // 8                  # 4
    Eo = out_channels // 8                # 4
    modes = 4

    index = get_frequency_modes(L, modes=modes, mode_select_method='random')

    key = jax.random.PRNGKey(0)
    kq, kk, kv, kw1, kw2 = jax.random.split(key, 5)
    q = jax.random.normal(kq, (B, L, H, E), dtype=jnp.float32)
    k = jax.random.normal(kk, (B, L, H, E), dtype=jnp.float32)
    v = jax.random.normal(kv, (B, L, H, E), dtype=jnp.float32)
    mask = None

    # Deterministic parameter init matching __init__: scale * U[0,1)
    scale = 1.0 / (in_channels * out_channels)
    wre = scale * jax.random.uniform(kw1, (8, E, Eo, len(index)), dtype=jnp.float32)
    wim = scale * jax.random.uniform(kw2, (8, E, Eo, len(index)), dtype=jnp.float32)

    out, _ = fourier_block_forward(q, k, v, mask, wre, wim, index)
    out = jax.block_until_ready(out)

    ref = reference_forward(q, wre, wim, index)
    err = float(jnp.max(jnp.abs(out - ref)))
    assert err < 5e-5, f"max abs err {err}"
    print("KERNEL_OK")
</pallas_src>

<mosaic_0001>
module attributes {stable_mosaic.version = 11 : i64} {
  func.func @fourier_block_kernel(%arg0: i32, %arg1: i32, %arg2: memref<1x8x16xf32, #tpu.memory_space<vmem>>, %arg3: memref<1x2x4x4x4xf32, #tpu.memory_space<vmem>>, %arg4: memref<16x8xf32, #tpu.memory_space<vmem>>, %arg5: memref<8x128xf32, #tpu.memory_space<vmem>>, %arg6: memref<1x8x128xf32, #tpu.memory_space<vmem>>, %arg7: memref<8x8xf32, #tpu.memory_space<vmem>>) attributes {dimension_semantics = [#tpu.dimension_semantics<parallel>, #tpu.dimension_semantics<parallel>], iteration_bounds = array<i64: 8, 1>, scalar_prefetch = 0 : i64, scratch_operands = 1 : i64, tpu.core_type = #tpu.core_type<tc>, window_params = [{transform_indices = @transform_0, window_bounds = array<i64: 1, 8, 16>}, {transform_indices = @transform_1, window_bounds = array<i64: 1, 2, 4, 4, 4>}, {pipeline_mode = #tpu.pipeline_mode<synchronous>, transform_indices = @transform_2, window_bounds = array<i64: 16, 8>}, {pipeline_mode = #tpu.pipeline_mode<synchronous>, transform_indices = @transform_3, window_bounds = array<i64: 8, 128>}, {transform_indices = @transform_4, window_bounds = array<i64: 1, 8, 128>}]} {
    %c0 = arith.constant 0 : index
    %c0_0 = arith.constant 0 : index
    %c0_1 = arith.constant 0 : index
    %0 = vector.load %arg2[%c0, %c0_0, %c0_1] : memref<1x8x16xf32, #tpu.memory_space<vmem>>, vector<1x8x16xf32>
    %1 = vector.shape_cast %0 : vector<1x8x16xf32> to vector<8x16xf32>
    %c0_2 = arith.constant 0 : index
    %c0_3 = arith.constant 0 : index
    %2 = vector.load %arg4[%c0_2, %c0_3] : memref<16x8xf32, #tpu.memory_space<vmem>>, vector<16x8xf32>
    %cst = arith.constant dense<0.000000e+00> : vector<8x8xf32>
    %3 = tpu.matmul %1, %2, %cst {dimension_numbers = #tpu.dot_dimension_numbers<[1], [0], [0], [1], [0, 0, 1, 1], [], []>, precision = #tpu.contract_precision<fp32>} : vector<8x16xf32>, vector<16x8xf32>, vector<8x8xf32> -> vector<8x8xf32>
    %c0_4 = arith.constant 0 : index
    %c0_5 = arith.constant 0 : index
    %c0_6 = arith.constant 0 : index
    %c0_7 = arith.constant 0 : index
    %c0_8 = arith.constant 0 : index
    %4 = vector.load %arg3[%c0_4, %c0_5, %c0_6, %c0_7, %c0_8] : memref<1x2x4x4x4xf32, #tpu.memory_space<vmem>>, vector<1x1x4x4x4xf32>
    %5 = vector.shape_cast %4 : vector<1x1x4x4x4xf32> to vector<4x4x4xf32>
    %c0_9 = arith.constant 0 : index
    %c1 = arith.constant 1 : index
    %c0_10 = arith.constant 0 : index
    %c0_11 = arith.constant 0 : index
    %c0_12 = arith.constant 0 : index
    %6 = vector.load %arg3[%c0_9, %c1, %c0_10, %c0_11, %c0_12] : memref<1x2x4x4x4xf32, #tpu.memory_space<vmem>>, vector<1x1x4x4x4xf32>
    %7 = vector.shape_cast %6 : vector<1x1x4x4x4xf32> to vector<4x4x4xf32>
    %8 = arith.subf %7, %5 : vector<4x4x4xf32>
    %9 = arith.addf %5, %7 : vector<4x4x4xf32>
    %10 = vector.extract_strided_slice %3 {offsets = [0, 0], sizes = [4, 4], strides = [1, 1]} : vector<8x8xf32> to vector<4x4xf32>
    %11 = vector.extract_strided_slice %3 {offsets = [0, 4], sizes = [4, 4], strides = [1, 1]} : vector<8x8xf32> to vector<4x4xf32>
    %12 = arith.addf %10, %11 : vector<4x4xf32>
    %13 = vector.shape_cast %12 : vector<4x4xf32> to vector<4x1x4xf32>
    %14 = vector.broadcast %13 : vector<4x1x4xf32> to vector<4x4x4xf32>
    %15 = arith.mulf %5, %14 : vector<4x4x4xf32>
    %16 = vector.shape_cast %10 : vector<4x4xf32> to vector<4x1x4xf32>
    %17 = vector.broadcast %16 : vector<4x1x4xf32> to vector<4x4x4xf32>
    %18 = arith.mulf %8, %17 : vector<4x4x4xf32>
    %19 = vector.shape_cast %11 : vector<4x4xf32> to vector<4x1x4xf32>
    %20 = vector.broadcast %19 : vector<4x1x4xf32> to vector<4x4x4xf32>
    %21 = arith.mulf %9, %20 : vector<4x4x4xf32>
    %22 = arith.subf %15, %21 : vector<4x4x4xf32>
    %cst_13 = arith.constant dense<0.000000e+00> : vector<4x4xf32>
    %23 = vector.multi_reduction <add>, %22, %cst_13 [0] : vector<4x4x4xf32> to vector<4x4xf32>
    %c0_14 = arith.constant 0 : index
    %c0_15 = arith.constant 0 : index
    %24 = vector.load %arg7[%c0_14, %c0_15] : memref<8x8xf32, #tpu.memory_space<vmem>>, vector<4x4xf32>
    tpu.vector_store %arg7[%c0_14, %c0_15], %23 {strides = array<i32>} : memref<8x8xf32, #tpu.memory_space<vmem>>, vector<4x4xf32>,
    %25 = arith.addf %15, %18 : vector<4x4x4xf32>
    %cst_16 = arith.constant dense<0.000000e+00> : vector<4x4xf32>
    %26 = vector.multi_reduction <add>, %25, %cst_16 [0] : vector<4x4x4xf32> to vector<4x4xf32>
    %c0_17 = arith.constant 0 : index
    %c4 = arith.constant 4 : index
    %27 = vector.load %arg7[%c0_17, %c4] : memref<8x8xf32, #tpu.memory_space<vmem>>, vector<4x4xf32>
    tpu.vector_store %arg7[%c0_17, %c4], %26 {strides = array<i32>} : memref<8x8xf32, #tpu.memory_space<vmem>>, vector<4x4xf32>,
    %28 = vector.extract_strided_slice %3 {offsets = [4, 0], sizes = [4, 4], strides = [1, 1]} : vector<8x8xf32> to vector<4x4xf32>
    %29 = vector.extract_strided_slice %3 {offsets = [4, 4], sizes = [4, 4], strides = [1, 1]} : vector<8x8xf32> to vector<4x4xf32>
    %30 = arith.addf %28, %29 : vector<4x4xf32>
    %31 = vector.shape_cast %30 : vector<4x4xf32> to vector<4x1x4xf32>
    %32 = vector.broadcast %31 : vector<4x1x4xf32> to vector<4x4x4xf32>
    %33 = arith.mulf %5, %32 : vector<4x4x4xf32>
    %34 = vector.shape_cast %28 : vector<4x4xf32> to vector<4x1x4xf32>
    %35 = vector.broadcast %34 : vector<4x1x4xf32> to vector<4x4x4xf32>
    %36 = arith.mulf %8, %35 : vector<4x4x4xf32>
    %37 = vector.shape_cast %29 : vector<4x4xf32> to vector<4x1x4xf32>
    %38 = vector.broadcast %37 : vector<4x1x4xf32> to vector<4x4x4xf32>
    %39 = arith.mulf %9, %38 : vector<4x4x4xf32>
    %40 = arith.subf %33, %39 : vector<4x4x4xf32>
    %cst_18 = arith.constant dense<0.000000e+00> : vector<4x4xf32>
    %41 = vector.multi_reduction <add>, %40, %cst_18 [0] : vector<4x4x4xf32> to vector<4x4xf32>
    %c4_19 = arith.constant 4 : index
    %c0_20 = arith.constant 0 : index
    %42 = vector.load %arg7[%c4_19, %c0_20] : memref<8x8xf32, #tpu.memory_space<vmem>>, vector<4x4xf32>
    tpu.vector_store %arg7[%c4_19, %c0_20], %41 {strides = array<i32>} : memref<8x8xf32, #tpu.memory_space<vmem>>, vector<4x4xf32>,
    %43 = arith.addf %33, %36 : vector<4x4x4xf32>
    %cst_21 = arith.constant dense<0.000000e+00> : vector<4x4xf32>
    %44 = vector.multi_reduction <add>, %43, %cst_21 [0] : vector<4x4x4xf32> to vector<4x4xf32>
    %c4_22 = arith.constant 4 : index
    %c4_23 = arith.constant 4 : index
    %45 = vector.load %arg7[%c4_22, %c4_23] : memref<8x8xf32, #tpu.memory_space<vmem>>, vector<4x4xf32>
    tpu.vector_store %arg7[%c4_22, %c4_23], %44 {strides = array<i32>} : memref<8x8xf32, #tpu.memory_space<vmem>>, vector<4x4xf32>,
    %c0_24 = arith.constant 0 : index
    %c0_25 = arith.constant 0 : index
    %46 = vector.load %arg7[%c0_24, %c0_25] : memref<8x8xf32, #tpu.memory_space<vmem>>, vector<8x8xf32>
    %c0_26 = arith.constant 0 : index
    %c0_27 = arith.constant 0 : index
    %47 = vector.load %arg5[%c0_26, %c0_27] : memref<8x128xf32, #tpu.memory_space<vmem>>, vector<8x128xf32>
    %cst_28 = arith.constant dense<0.000000e+00> : vector<8x128xf32>
    %48 = tpu.matmul %46, %47, %cst_28 {dimension_numbers = #tpu.dot_dimension_numbers<[1], [0], [0], [1], [0, 0, 1, 1], [], []>, precision = #tpu.contract_precision<fp32>} : vector<8x8xf32>, vector<8x128xf32>, vector<8x128xf32> -> vector<8x128xf32>
    %c0_29 = arith.constant 0 : index
    %c0_30 = arith.constant 0 : index
    %c0_31 = arith.constant 0 : index
    %49 = vector.load %arg6[%c0_29, %c0_30, %c0_31] : memref<1x8x128xf32, #tpu.memory_space<vmem>>, vector<1x8x128xf32>
    %50 = vector.shape_cast %49 : vector<1x8x128xf32> to vector<8x128xf32>
    %51 = vector.shape_cast %48 : vector<8x128xf32> to vector<1x8x128xf32>
    tpu.vector_store %arg6[%c0_29, %c0_30, %c0_31], %51 {strides = array<i32>} : memref<1x8x128xf32, #tpu.memory_space<vmem>>, vector<1x8x128xf32>,
    return
  }
  func.func @transform_0(%arg0: i32, %arg1: i32) -> (i32, i32, i32) {
    %c0_i32 = arith.constant 0 : i32
    %c0_i32_0 = arith.constant 0 : i32
    return %arg0, %arg1, %c0_i32 : i32, i32, i32
  }
  func.func @transform_1(%arg0: i32, %arg1: i32) -> (i32, i32, i32, i32, i32) {
    %c0_i32 = arith.constant 0 : i32
    %c0_i32_0 = arith.constant 0 : i32
    %c0_i32_1 = arith.constant 0 : i32
    %c0_i32_2 = arith.constant 0 : i32
    %c0_i32_3 = arith.constant 0 : i32
    return %arg0, %c0_i32, %c0_i32_0, %c0_i32_1, %c0_i32_2 : i32, i32, i32, i32, i32
  }
  func.func @transform_2(%arg0: i32, %arg1: i32) -> (i32, i32) {
    %c0_i32 = arith.constant 0 : i32
    %c0_i32_0 = arith.constant 0 : i32
    %c0_i32_1 = arith.constant 0 : i32
    return %c0_i32, %c0_i32_0 : i32, i32
  }
  func.func @transform_3(%arg0: i32, %arg1: i32) -> (i32, i32) {
    %c0_i32 = arith.constant 0 : i32
    %c0_i32_0 = arith.constant 0 : i32
    %c0_i32_1 = arith.constant 0 : i32
    return %c0_i32, %c0_i32_0 : i32, i32
  }
  func.func @transform_4(%arg0: i32, %arg1: i32) -> (i32, i32, i32) {
    %c0_i32 = arith.constant 0 : i32
    %c0_i32_0 = arith.constant 0 : i32
    return %arg0, %arg1, %c0_i32 : i32, i32, i32
  }
}

</mosaic_0001>

<llo_original>
// kernel: tpu_custom_call.1
$region0: #{tpu_custom_call.1}
  #allocation0 [shape = 'u32[]', space=smem, size = 0x4, offset = 0x4, fixed_abs, tag = 'smem constant byte address 0x4 - core index']
  #allocation1 [shape = 'u32[144,128]{1,0:T(1,128)}', space=vmem, size = 0x12000, scoped, tag = 'internal scratch']
  #allocation2 [shape = 'f32[8,8]{1,0:T(8,128)}', space=vmem, size = 0x1000, scoped, tag = 'scratch operand']
  %s0 = inlined_call_operand.vmem [shape: f32[8,8,16], index: 0, kind: input, shape index: {}]
  %s1 = inlined_call_operand.vmem [shape: f32[8,2,4,4,4], index: 1, kind: input, shape index: {}]
  %s2 = inlined_call_operand.vmem [shape: f32[16,8], index: 2, kind: input, shape index: {}]
  %s3 = inlined_call_operand.vmem [shape: f32[8,128], index: 3, kind: input, shape index: {}]
  %s4 = inlined_call_operand.hbm [shape: f32[8,8,128], index: 4, kind: output, shape index: {}]
  %s5 = sld [smem:[#allocation0]]
  $region49: #{tpu_custom_call.1} parent=0
    _
  %s7 = ssub.s32 1, %s5
  %s8 = scalar_select 0, %s7, %s5
  $region1: #{tpu_custom_call.1} parent=0
    #allocation3 [shape = 'u8[8192]{0}', space=vmem, size = 0x2000, scoped, tag = 'output window, operand 0']
    #allocation4 [shape = 's32[2]{0}', space=sflag, size = 0x8, scoped, tag = 'scoped memory for tpu_custom_call.1']
    %9 = vsyncpa [#allocation4], 0
    %s10 = scalar_lea.sflag [#allocation4], 1
    %11 = vsyncpa %s10, 0
    loop: start=0, step=1, limit=10
    $region2: #{tpu_custom_call.1} parent=1 // loop_pre_header
      _
    $region3: #{tpu_custom_call.1} parent=1 // loop_header
      %s13 = sphi 0, %s17
      %p14 = scmp.ge.s32.totalorder %s13, 10
      %s20 = sphi 0, %s32
      %s21 = sphi 0, %s28
      %s22 = sphi 0, %s20
      %s23 = sphi 0, %s21
      %s24 = sphi 0, %s22
      %s25 = sphi 0, %s23
      %s37 = sphi 0, %s39
      %s40 = sphi 0, %s37
      %s41 = sphi 0, %s40
      %s57 = sphi 0, %s41
      %s63 = sphi 0, %s65
      %s66 = sphi 0, %s63
      %s67 = sphi 0, %s66
      %s83 = sphi 0, %s67
      %s87 = sphi 0, %s87
      %s89 = sphi 0, %s87
      %s90 = sphi 0, %s89
      %s104 = sphi 0, %s90
      %s108 = sphi 0, %s108
      %s110 = sphi 0, %s108
      %s111 = sphi 0, %s110
      %s125 = sphi 0, %s111
      %s133 = sphi 0, %s135
      %s136 = sphi 0, %s133
      %s137 = sphi 0, %s136
      %s153 = sphi 0, %s137
    $region4: #{tpu_custom_call.1} parent=1 // loop_header_branch
      %16 = sbr.rel (%p14) target = $region8
    $region5: #{tpu_custom_call.1} parent=1 // loop_body
      %s18 = ssub.s32 %s13, 1
      %s19 = ssub.s32 %s13, 2
      %s26 = sadd.s32 1, %s21
      %p27 = scmp.ge.s32.totalorder %s26, 1
      %s28 = scalar_select %p27, 0, %s26
      %s29 = sadd.s32 1, %s20
      %s30 = scalar_select %p27, %s29, %s20
      %p31 = scmp.ge.s32.totalorder %s30, 8
      %s32 = scalar_select %p31, 0, %s30
      %s33 = ssub.s32 %s20, %s32
      %s34 = ssub.s32 %s21, %s28
      %s35 = sor.u32 %s33, %s34
      %p36 = scmp.eq.s32.totalorder %s35, 0
      %s38 = sadd.s32 %s37, 1
      %s39 = scalar_select %p36, %s37, %s38
      %p42 = pneg %p36
      %p43 = scmp.eq.s32.totalorder %s13, 7
      %p44 = por %p42, %p43
      %p45 = scmp.ne.s32.totalorder %s37, %s40
      %p46 = scmp.eq.s32.totalorder %s13, 0
      %p47 = por %p45, %p46
      %p48 = scmp.ne.s32.totalorder %s37, %s40
      %p49 = scmp.eq.s32.totalorder %s18, 7
      %p50 = por %p48, %p49
      %p51 = scmp.ne.s32.totalorder %s40, %s41
      %p52 = scmp.eq.s32.totalorder %s18, 0
      %p53 = por %p51, %p52
      %p54 = scmp.ne.s32.totalorder %s40, %s41
      %p55 = scmp.eq.s32.totalorder %s19, 7
      %p56 = por %p54, %p55
      %p58 = scmp.ne.s32.totalorder %s41, %s57
      %p59 = scmp.eq.s32.totalorder %s19, 0
      %p60 = por %p58, %p59
      %s61 = ssub.s32 %s20, %s32
      %p62 = scmp.eq.s32.totalorder %s61, 0
      %s64 = sadd.s32 %s63, 1
      %s65 = scalar_select %p62, %s63, %s64
      %p68 = pneg %p62
      %p69 = scmp.eq.s32.totalorder %s13, 7
      %p70 = por %p68, %p69
      %p71 = scmp.ne.s32.totalorder %s63, %s66
      %p72 = scmp.eq.s32.totalorder %s13, 0
      %p73 = por %p71, %p72
      %p74 = scmp.ne.s32.totalorder %s63, %s66
      %p75 = scmp.eq.s32.totalorder %s18, 7
      %p76 = por %p74, %p75
      %p77 = scmp.ne.s32.totalorder %s66, %s67
      %p78 = scmp.eq.s32.totalorder %s18, 0
      %p79 = por %p77, %p78
      %p80 = scmp.ne.s32.totalorder %s66, %s67
      %p81 = scmp.eq.s32.totalorder %s19, 7
      %p82 = por %p80, %p81
      %p84 = scmp.ne.s32.totalorder %s67, %s83
      %p85 = scmp.eq.s32.totalorder %s19, 0
      %p86 = por %p84, %p85
      %s88 = sadd.s32 %s87, 1
      %p91 = scmp.eq.s32.totalorder %s13, 7
      %p92 = scmp.ne.s32.totalorder %s87, %s89
      %p93 = scmp.eq.s32.totalorder %s13, 0
      %p94 = por %p92, %p93
      %p95 = scmp.ne.s32.totalorder %s87, %s89
      %p96 = scmp.eq.s32.totalorder %s18, 7
      %p97 = por %p95, %p96
      %p98 = scmp.ne.s32.totalorder %s89, %s90
      %p99 = scmp.eq.s32.totalorder %s18, 0
      %p100 = por %p98, %p99
      %p101 = scmp.ne.s32.totalorder %s89, %s90
      %p102 = scmp.eq.s32.totalorder %s19, 7
      %p103 = por %p101, %p102
      %p105 = scmp.ne.s32.totalorder %s90, %s104
      %p106 = scmp.eq.s32.totalorder %s19, 0
      %p107 = por %p105, %p106
      %s109 = sadd.s32 %s108, 1
      %p112 = scmp.eq.s32.totalorder %s13, 7
      %p113 = scmp.ne.s32.totalorder %s108, %s110
      %p114 = scmp.eq.s32.totalorder %s13, 0
      %p115 = por %p113, %p114
      %p116 = scmp.ne.s32.totalorder %s108, %s110
      %p117 = scmp.eq.s32.totalorder %s18, 7
      %p118 = por %p116, %p117
      %p119 = scmp.ne.s32.totalorder %s110, %s111
      %p120 = scmp.eq.s32.totalorder %s18, 0
      %p121 = por %p119, %p120
      %p122 = scmp.ne.s32.totalorder %s110, %s111
      %p123 = scmp.eq.s32.totalorder %s19, 7
      %p124 = por %p122, %p123
      %p126 = scmp.ne.s32.totalorder %s111, %s125
      %p127 = scmp.eq.s32.totalorder %s19, 0
      %p128 = por %p126, %p127
      %s129 = ssub.s32 %s20, %s32
      %s130 = ssub.s32 %s21, %s28
      %s131 = sor.u32 %s129, %s130
      %p132 = scmp.eq.s32.totalorder %s131, 0
      %s134 = sadd.s32 %s133, 1
      %s135 = scalar_select %p132, %s133, %s134
      %p138 = pneg %p132
      %p139 = scmp.eq.s32.totalorder %s13, 7
      %p140 = por %p138, %p139
      %p141 = scmp.ne.s32.totalorder %s133, %s136
      %p142 = scmp.eq.s32.totalorder %s13, 0
      %p143 = por %p141, %p142
      %p144 = scmp.ne.s32.totalorder %s133, %s136
      %p145 = scmp.eq.s32.totalorder %s18, 7
      %p146 = por %p144, %p145
      %p147 = scmp.ne.s32.totalorder %s136, %s137
      %p148 = scmp.eq.s32.totalorder %s18, 0
      %p149 = por %p147, %p148
      %p150 = scmp.ne.s32.totalorder %s136, %s137
      %p151 = scmp.eq.s32.totalorder %s19, 7
      %p152 = por %p150, %p151
      %p154 = scmp.ne.s32.totalorder %s137, %s153
      %p155 = scmp.eq.s32.totalorder %s19, 0
      %p156 = por %p154, %p155
      %p157 = scmp.le.s32.totalorder 1, %s13
      %p158 = scmp.lt.s32.totalorder %s13, 9
      %p159 = pnand %p157, %p158
      %p160 = pneg %p159
      // Predicated region
      $region9: #{tpu_custom_call.1} parent=5 // pred_check
        _
      $region10: #{tpu_custom_call.1} parent=5 // pred_check_branch
        %162 = sbr.rel (%p159) target = $region12
      $region11: #{tpu_custom_call.1} parent=5 // pred_region
        %s163 = ssub.s32 %s13, 1
        // Predicated region
        $region13: #{tpu_custom_call.1} parent=11 // pred_check
          %p164 = pneg %p100
        $region14: #{tpu_custom_call.1} parent=11 // pred_check_branch
          %166 = sbr.rel (%p164) target = $region16
        $region15: #{tpu_custom_call.1} parent=11 // pred_region
          _
        $region16: #{tpu_custom_call.1} parent=11 // pred_fallthru
          _
        // Predicated region
        $region17: #{tpu_custom_call.1} parent=11 // pred_check
          %p167 = pneg %p121
        $region18: #{tpu_custom_call.1} parent=11 // pred_check_branch
          %169 = sbr.rel (%p167) target = $region20
        $region19: #{tpu_custom_call.1} parent=11 // pred_region
          _
        $region20: #{tpu_custom_call.1} parent=11 // pred_fallthru
          _
      $region12: #{tpu_custom_call.1} parent=5 // pred_fallthru
        _
      %p170 = scmp.lt.s32.totalorder %s13, 8
      // Predicated region
      $region21: #{tpu_custom_call.1} parent=5 // pred_check
        %p171 = pneg %p170
      $region22: #{tpu_custom_call.1} parent=5 // pred_check_branch
        %173 = sbr.rel (%p171) target = $region24
      $region23: #{tpu_custom_call.1} parent=5 // pred_region
        // Predicated region
        $region25: #{tpu_custom_call.1} parent=23 // pred_check
          %p174 = pneg %p47
        $region26: #{tpu_custom_call.1} parent=23 // pred_check_branch
          %176 = sbr.rel (%p174) target = $region28
        $region27: #{tpu_custom_call.1} parent=23 // pred_region
          %p177 = scmp.lt.s32.totalorder %s20, 7
          %s178 = scalar_select %p177, %s20, 7
          %p179 = scmp.lt.s32.totalorder %s21, 0
          %s180 = scalar_select %p179, %s21, 0
          %s181 = sadd.s32 %s180, %s178
          %s182 = smul.addr %s181, 8
          %s183 = scalar_lea.vmem %s0, %s182
        $region28: #{tpu_custom_call.1} parent=23 // pred_fallthru
          _
        // Predicated region
        $region29: #{tpu_custom_call.1} parent=23 // pred_check
          %p184 = pneg %p73
        $region30: #{tpu_custom_call.1} parent=23 // pred_check_branch
          %186 = sbr.rel (%p184) target = $region32
        $region31: #{tpu_custom_call.1} parent=23 // pred_region
          %p187 = scmp.lt.s32.totalorder %s20, 7
          %s188 = scalar_select %p187, %s20, 7
          %s189 = smul.addr %s188, 8
          %s190 = smul.addr %s189, 4
          %s191 = scalar_lea.vmem %s1, %s190
        $region32: #{tpu_custom_call.1} parent=23 // pred_fallthru
          _
      $region24: #{tpu_custom_call.1} parent=5 // pred_fallthru
        _
      %p192 = scmp.le.s32.totalorder 1, %s13
      %p193 = scmp.lt.s32.totalorder %s13, 9
      %p194 = pnand %p192, %p193
      %p195 = pneg %p194
      // Predicated region
      $region33: #{tpu_custom_call.1} parent=5 // pred_check
        _
      $region34: #{tpu_custom_call.1} parent=5 // pred_check_branch
        %197 = sbr.rel (%p194) target = $region36
      $region35: #{tpu_custom_call.1} parent=5 // pred_region
        %s198 = ssub.s32 %s13, 1
        %p199 = scmp.lt.s32.totalorder %s22, 7
        %s200 = scalar_select %p199, %s22, 7
        %p201 = scmp.lt.s32.totalorder %s23, 0
        %s202 = scalar_select %p201, %s23, 0
        %s203 = sadd.s32 %s202, %s200
        %s204 = smul.addr %s203, 8
        %s205 = scalar_lea.vmem %s0, %s204
        %p206 = pneg %p53
        %p207 = pneg %p50
        %p208 = scmp.lt.s32.totalorder %s22, 7
        %s209 = scalar_select %p208, %s22, 7
        %s210 = smul.addr %s209, 8
        %s211 = smul.addr %s210, 4
        %s212 = scalar_lea.vmem %s1, %s211
        %p213 = pneg %p79
        %p214 = pneg %p76
        %p215 = pneg %p100
        %p216 = pneg %p97
        %p217 = pneg %p121
        %p218 = pneg %p118
        %p219 = pneg %p149
        %p220 = pneg %p146
        %s221 = sand.u32 %s136, 1
        %s222 = scalar_lea.sflag [#allocation4], %s221
        %s223 = sand.u32 %s136, 1
        %s224 = smul.addr %s223, 8
        %s225 = scalar_lea.vmem [#allocation3], %s224
        %p226 = scmp.lt.s32.totalorder %s22, 7
        %s227 = scalar_select %p226, %s22, 7
        %p228 = scmp.lt.s32.totalorder %s23, 0
        %s229 = scalar_select %p228, %s23, 0
        %s230 = sadd.s32 %s229, %s227
        %s231 = smul.addr %s230, 8
        %s232 = scalar_lea.vmem %s0, %s231
        %p233 = scmp.lt.s32.totalorder %s22, 7
        %s234 = scalar_select %p233, %s22, 7
        %s235 = smul.addr %s234, 8
        %s236 = smul.addr %s235, 4
        %s237 = scalar_lea.vmem %s1, %s236
        %v238 = vld [vmem:[%s232] sm:$0xff]
        %v239 = vld [vmem:[%s2] sm:$0xff]
        %v240 = vld [vmem:[%s2 + $0x8] sm:$0xff]
        %vm241 = vcmask 130048
        %v243 = vsel %vm241, %v238, 0
        %245 = vmatprep.subr.mxu0 0.0
        %v246 = vand.u32 %v239, 4294901760
        %247 = vmatpush1.msra.mxu0 %v246
        %248 = vmatprep.subr.mxu0 0.0
        %v249 = vand.u32 %v240, 4294901760
        %250 = vmatpush1.msra.mxu0 %v249
        %251 = vmatprep.subr.mxu0 0.0
        %252 = vmatpush1.msra.mxu0 0.0
        %253 = vmatprep.subr.mxu0 0.0
        %254 = vmatpush1.msra.mxu0 0.0
        %255 = vmatprep.subr.mxu0 0.0
        %256 = vmatpush1.msra.mxu0 0.0
        %257 = vmatprep.subr.mxu0 0.0
        %258 = vmatpush1.msra.mxu0 0.0
        %259 = vmatprep.subr.mxu0 0.0
        %260 = vmatpush1.msra.mxu0 0.0
        %261 = vmatprep.subr.mxu0 0.0
        %262 = vmatpush1.msra.mxu0 0.0
        %263 = vmatprep.subr.mxu0 0.0
        %264 = vmatpush1.msra.mxu0 0.0
        %265 = vmatprep.subr.mxu0 0.0
        %266 = vmatpush1.msra.mxu0 0.0
        %267 = vmatprep.subr.mxu0 0.0
        %268 = vmatpush1.msra.mxu0 0.0
        %269 = vmatprep.subr.mxu0 0.0
        %270 = vmatpush1.msra.mxu0 0.0
        %271 = vmatprep.subr.mxu0 0.0
        %272 = vmatpush1.msra.mxu0 0.0
        %273 = vmatprep.subr.mxu0 0.0
        %274 = vmatpush1.msra.mxu0 0.0
        %275 = vmatprep.subr.mxu0 0.0
        %276 = vmatpush1.msra.mxu0 0.0
        %277 = vmatprep.subr.mxu0 0.0
        %278 = vmatpush1.msra.mxu0 0.0
        %279 = vmatprep.subr.mxu0 0.0
        %280 = vmatpush1.msra.mxu0 0.0
        %281 = vmatprep.subr.mxu0 0.0
        %282 = vmatpush1.msra.mxu0 0.0
        %283 = vmatprep.subr.mxu0 0.0
        %284 = vmatpush1.msra.mxu0 0.0
        %285 = vmatprep.subr.mxu0 0.0
        %286 = vmatpush1.msra.mxu0 0.0
        %287 = vmatprep.subr.mxu0 0.0
        %288 = vmatpush1.msra.mxu0 0.0
        %289 = vmatprep.subr.mxu0 0.0
        %290 = vmatpush1.msra.mxu0 0.0
        %291 = vmatprep.subr.mxu0 0.0
        %292 = vmatpush1.msra.mxu0 0.0
        %293 = vmatprep.subr.mxu0 0.0
        %294 = vmatpush1.msra.mxu0 0.0
        %295 = vmatprep.subr.mxu0 0.0
        %296 = vmatpush1.msra.mxu0 0.0
        %297 = vmatprep.subr.mxu0 0.0
        %298 = vmatpush1.msra.mxu0 0.0
        %299 = vmatprep.subr.mxu0 0.0
        %300 = vmatpush1.msra.mxu0 0.0
        %301 = vmatprep.subr.mxu0 0.0
        %302 = vmatpush1.msra.mxu0 0.0
        %303 = vmatprep.subr.mxu0 0.0
        %304 = vmatpush1.msra.mxu0 0.0
        %305 = vmatprep.subr.mxu0 0.0
        %306 = vmatpush1.msra.mxu0 0.0
        %307 = vmatprep.subr.mxu0 0.0
        %308 = vmatpush1.msra.mxu0 0.0
        %309 = vmatprep.subr.mxu0 0.0
        %310 = vmatpush1.msra.mxu0 0.0
        %311 = vmatprep.mubr.f32.mxu0 0.0
        %v312 = vand.u32 %v243, 4294901760
        %v313 = vsub.f32 %v243, %v312
        %v314 = vand.u32 %v313, 4294901760
        %v315 = vsub.f32 %v313, %v314
        %v316 = vand.u32 %v315, 4294901760
        %317 = vmatmul.mubr.f32.gmra.mrb[0].mxu0 %v316
        %v318 = vpop.f32.mrb[0].mxu0
        %v319 = vadd.f32 0.0, %v318
        %v320 = vpop.f32.mrb[0].mxu0
        %321 = vdwg.mxu0
        %322 = vmatprep.subr.mxu0 0.0
        %v323 = vand.u32 %v239, 4294901760
        %v324 = vsub.f32 %v239, %v323
        %v325 = vand.u32 %v324, 4294901760
        %v326 = vsub.f32 %v324, %v325
        %v327 = vand.u32 %v326, 4294901760
        %328 = vmatpush1.msra.mxu0 %v327
        %329 = vmatprep.subr.mxu0 0.0
        %v330 = vand.u32 %v240, 4294901760
        %v331 = vsub.f32 %v240, %v330
        %v332 = vand.u32 %v331, 4294901760
        %v333 = vsub.f32 %v331, %v332
        %v334 = vand.u32 %v333, 4294901760
        %335 = vmatpush1.msra.mxu0 %v334
        %336 = vmatprep.subr.mxu0 0.0
        %337 = vmatpush1.msra.mxu0 0.0
        %338 = vmatprep.subr.mxu0 0.0
        %339 = vmatpush1.msra.mxu0 0.0
        %340 = vmatprep.subr.mxu0 0.0
        %341 = vmatpush1.msra.mxu0 0.0
        %342 = vmatprep.subr.mxu0 0.0
        %343 = vmatpush1.msra.mxu0 0.0
        %344 = vmatprep.subr.mxu0 0.0
        %345 = vmatpush1.msra.mxu0 0.0
        %346 = vmatprep.subr.mxu0 0.0
        %347 = vmatpush1.msra.mxu0 0.0
        %348 = vmatprep.subr.mxu0 0.0
        %349 = vmatpush1.msra.mxu0 0.0
        %350 = vmatprep.subr.mxu0 0.0
        %351 = vmatpush1.msra.mxu0 0.0
        %352 = vmatprep.subr.mxu0 0.0
        %353 = vmatpush1.msra.mxu0 0.0
        %354 = vmatprep.subr.mxu0 0.0
        %355 = vmatpush1.msra.mxu0 0.0
        %356 = vmatprep.subr.mxu0 0.0
        %357 = vmatpush1.msra.mxu0 0.0
        %358 = vmatprep.subr.mxu0 0.0
        %359 = vmatpush1.msra.mxu0 0.0
        %360 = vmatprep.subr.mxu0 0.0
        %361 = vmatpush1.msra.mxu0 0.0
        %362 = vmatprep.subr.mxu0 0.0
        %363 = vmatpush1.msra.mxu0 0.0
        %364 = vmatprep.subr.mxu0 0.0
        %365 = vmatpush1.msra.mxu0 0.0
        %366 = vmatprep.subr.mxu0 0.0
        %367 = vmatpush1.msra.mxu0 0.0
        %368 = vmatprep.subr.mxu0 0.0
        %369 = vmatpush1.msra.mxu0 0.0
        %370 = vmatprep.subr.mxu0 0.0
        %371 = vmatpush1.msra.mxu0 0.0
        %372 = vmatprep.subr.mxu0 0.0
        %373 = vmatpush1.msra.mxu0 0.0
        %374 = vmatprep.subr.mxu0 0.0
        %375 = vmatpush1.msra.mxu0 0.0
        %376 = vmatprep.subr.mxu0 0.0
        %377 = vmatpush1.msra.mxu0 0.0
        %378 = vmatprep.subr.mxu0 0.0
        %379 = vmatpush1.msra.mxu0 0.0
        %380 = vmatprep.subr.mxu0 0.0
        %381 = vmatpush1.msra.mxu0 0.0
        %382 = vmatprep.subr.mxu0 0.0
        %383 = vmatpush1.msra.mxu0 0.0
        %384 = vmatprep.subr.mxu0 0.0
        %385 = vmatpush1.msra.mxu0 0.0
        %386 = vmatprep.subr.mxu0 0.0
        %387 = vmatpush1.msra.mxu0 0.0
        %388 = vmatprep.subr.mxu0 0.0
        %389 = vmatpush1.msra.mxu0 0.0
        %390 = vmatprep.subr.mxu0 0.0
        %391 = vmatpush1.msra.mxu0 0.0
        %392 = vmatprep.subr.mxu0 0.0
        %393 = vmatpush1.msra.mxu0 0.0
        %394 = vmatprep.subr.mxu0 0.0
        %395 = vmatpush1.msra.mxu0 0.0
        %396 = vmatprep.mubr.f32.mxu0 0.0
        %v397 = vand.u32 %v243, 4294901760
        %398 = vmatmul.mubr.f32.gmra.mrb[0].mxu0 %v397
        %v399 = vpop.f32.mrb[0].mxu0
        %v400 = vadd.f32 %v319, %v399
        %v401 = vpop.f32.mrb[0].mxu0
        %402 = vdwg.mxu0
        %403 = vmatprep.subr.mxu0 0.0
        %v404 = vand.u32 %v239, 4294901760
        %v405 = vsub.f32 %v239, %v404
        %406 = vmatpush1.msra.mxu0 %v405
        %407 = vmatprep.subr.mxu0 0.0
        %v408 = vand.u32 %v240, 4294901760
        %v409 = vsub.f32 %v240, %v408
        %410 = vmatpush1.msra.mxu0 %v409
        %411 = vmatprep.subr.mxu0 0.0
        %412 = vmatpush1.msra.mxu0 0.0
        %413 = vmatprep.subr.mxu0 0.0
        %414 = vmatpush1.msra.mxu0 0.0
        %415 = vmatprep.subr.mxu0 0.0
        %416 = vmatpush1.msra.mxu0 0.0
        %417 = vmatprep.subr.mxu0 0.0
        %418 = vmatpush1.msra.mxu0 0.0
        %419 = vmatprep.subr.mxu0 0.0
        %420 = vmatpush1.msra.mxu0 0.0
        %421 = vmatprep.subr.mxu0 0.0
        %422 = vmatpush1.msra.mxu0 0.0
        %423 = vmatprep.subr.mxu0 0.0
        %424 = vmatpush1.msra.mxu0 0.0
        %425 = vmatprep.subr.mxu0 0.0
        %426 = vmatpush1.msra.mxu0 0.0
        %427 = vmatprep.subr.mxu0 0.0
        %428 = vmatpush1.msra.mxu0 0.0
        %429 = vmatprep.subr.mxu0 0.0
        %430 = vmatpush1.msra.mxu0 0.0
        %431 = vmatprep.subr.mxu0 0.0
        %432 = vmatpush1.msra.mxu0 0.0
        %433 = vmatprep.subr.mxu0 0.0
        %434 = vmatpush1.msra.mxu0 0.0
        %435 = vmatprep.subr.mxu0 0.0
        %436 = vmatpush1.msra.mxu0 0.0
        %437 = vmatprep.subr.mxu0 0.0
        %438 = vmatpush1.msra.mxu0 0.0
        %439 = vmatprep.subr.mxu0 0.0
        %440 = vmatpush1.msra.mxu0 0.0
        %441 = vmatprep.subr.mxu0 0.0
        %442 = vmatpush1.msra.mxu0 0.0
        %443 = vmatprep.subr.mxu0 0.0
        %444 = vmatpush1.msra.mxu0 0.0
        %445 = vmatprep.subr.mxu0 0.0
        %446 = vmatpush1.msra.mxu0 0.0
        %447 = vmatprep.subr.mxu0 0.0
        %448 = vmatpush1.msra.mxu0 0.0
        %449 = vmatprep.subr.mxu0 0.0
        %450 = vmatpush1.msra.mxu0 0.0
        %451 = vmatprep.subr.mxu0 0.0
        %452 = vmatpush1.msra.mxu0 0.0
        %453 = vmatprep.subr.mxu0 0.0
        %454 = vmatpush1.msra.mxu0 0.0
        %455 = vmatprep.subr.mxu0 0.0
        %456 = vmatpush1.msra.mxu0 0.0
        %457 = vmatprep.subr.mxu0 0.0
        %458 = vmatpush1.msra.mxu0 0.0
        %459 = vmatprep.subr.mxu0 0.0
        %460 = vmatpush1.msra.mxu0 0.0
        %461 = vmatprep.subr.mxu0 0.0
        %462 = vmatpush1.msra.mxu0 0.0
        %463 = vmatprep.subr.mxu0 0.0
        %464 = vmatpush1.msra.mxu0 0.0
        %465 = vmatprep.subr.mxu0 0.0
        %466 = vmatpush1.msra.mxu0 0.0
        %467 = vmatprep.subr.mxu0 0.0
        %468 = vmatpush1.msra.mxu0 0.0
        %469 = vmatprep.subr.mxu0 0.0
        %470 = vmatpush1.msra.mxu0 0.0
        %471 = vmatprep.mubr.f32.mxu0 0.0
        %v472 = vand.u32 %v243, 4294901760
        %v473 = vsub.f32 %v243, %v472
        %474 = vmatmul.mubr.f32.gmra.mrb[0].mxu0 %v473
        %v475 = vpop.f32.mrb[0].mxu0
        %v476 = vadd.f32 %v400, %v475
        %v477 = vpop.f32.mrb[0].mxu0
        %478 = vdwg.mxu0
        %479 = vmatprep.subr.mxu0 0.0
        %v480 = vand.u32 %v239, 4294901760
        %481 = vmatpush1.msra.mxu0 %v480
        %482 = vmatprep.subr.mxu0 0.0
        %v483 = vand.u32 %v240, 4294901760
        %484 = vmatpush1.msra.mxu0 %v483
        %485 = vmatprep.subr.mxu0 0.0
        %486 = vmatpush1.msra.mxu0 0.0
        %487 = vmatprep.subr.mxu0 0.0
        %488 = vmatpush1.msra.mxu0 0.0
        %489 = vmatprep.subr.mxu0 0.0
        %490 = vmatpush1.msra.mxu0 0.0
        %491 = vmatprep.subr.mxu0 0.0
        %492 = vmatpush1.msra.mxu0 0.0
        %493 = vmatprep.subr.mxu0 0.0
        %494 = vmatpush1.msra.mxu0 0.0
        %495 = vmatprep.subr.mxu0 0.0
        %496 = vmatpush1.msra.mxu0 0.0
        %497 = vmatprep.subr.mxu0 0.0
        %498 = vmatpush1.msra.mxu0 0.0
        %499 = vmatprep.subr.mxu0 0.0
        %500 = vmatpush1.msra.mxu0 0.0
        %501 = vmatprep.subr.mxu0 0.0
        %502 = vmatpush1.msra.mxu0 0.0
        %503 = vmatprep.subr.mxu0 0.0
        %504 = vmatpush1.msra.mxu0 0.0
        %505 = vmatprep.subr.mxu0 0.0
        %506 = vmatpush1.msra.mxu0 0.0
        %507 = vmatprep.subr.mxu0 0.0
        %508 = vmatpush1.msra.mxu0 0.0
        %509 = vmatprep.subr.mxu0 0.0
        %510 = vmatpush1.msra.mxu0 0.0
        %511 = vmatprep.subr.mxu0 0.0
        %512 = vmatpush1.msra.mxu0 0.0
        %513 = vmatprep.subr.mxu0 0.0
        %514 = vmatpush1.msra.mxu0 0.0
        %515 = vmatprep.subr.mxu0 0.0
        %516 = vmatpush1.msra.mxu0 0.0
        %517 = vmatprep.subr.mxu0 0.0
        %518 = vmatpush1.msra.mxu0 0.0
        %519 = vmatprep.subr.mxu0 0.0
        %520 = vmatpush1.msra.mxu0 0.0
        %521 = vmatprep.subr.mxu0 0.0
        %522 = vmatpush1.msra.mxu0 0.0
        %523 = vmatprep.subr.mxu0 0.0
        %524 = vmatpush1.msra.mxu0 0.0
        %525 = vmatprep.subr.mxu0 0.0
        %526 = vmatpush1.msra.mxu0 0.0
        %527 = vmatprep.subr.mxu0 0.0
        %528 = vmatpush1.msra.mxu0 0.0
        %529 = vmatprep.subr.mxu0 0.0
        %530 = vmatpush1.msra.mxu0 0.0
        %531 = vmatprep.subr.mxu0 0.0
        %532 = vmatpush1.msra.mxu0 0.0
        %533 = vmatprep.subr.mxu0 0.0
        %534 = vmatpush1.msra.mxu0 0.0
        %535 = vmatprep.subr.mxu0 0.0
        %536 = vmatpush1.msra.mxu0 0.0
        %537 = vmatprep.subr.mxu0 0.0
        %538 = vmatpush1.msra.mxu0 0.0
        %539 = vmatprep.subr.mxu0 0.0
        %540 = vmatpush1.msra.mxu0 0.0
        %541 = vmatprep.subr.mxu0 0.0
        %542 = vmatpush1.msra.mxu0 0.0
        %543 = vmatprep.subr.mxu0 0.0
        %544 = vmatpush1.msra.mxu0 0.0
        %545 = vmatprep.mubr.f32.mxu0 0.0
        %v546 = vand.u32 %v243, 4294901760
        %v547 = vsub.f32 %v243, %v546
        %v548 = vand.u32 %v547, 4294901760
        %549 = vmatmul.mubr.f32.gmra.mrb[0].mxu0 %v548
        %v550 = vpop.f32.mrb[0].mxu0
        %v551 = vadd.f32 %v476, %v550
        %v552 = vpop.f32.mrb[0].mxu0
        %553 = vdwg.mxu0
        %554 = vmatprep.subr.mxu0 0.0
        %v555 = vand.u32 %v239, 4294901760
        %v556 = vsub.f32 %v239, %v555
        %v557 = vand.u32 %v556, 4294901760
        %558 = vmatpush1.msra.mxu0 %v557
        %559 = vmatprep.subr.mxu0 0.0
        %v560 = vand.u32 %v240, 4294901760
        %v561 = vsub.f32 %v240, %v560
        %v562 = vand.u32 %v561, 4294901760
        %563 = vmatpush1.msra.mxu0 %v562
        %564 = vmatprep.subr.mxu0 0.0
        %565 = vmatpush1.msra.mxu0 0.0
        %566 = vmatprep.subr.mxu0 0.0
        %567 = vmatpush1.msra.mxu0 0.0
        %568 = vmatprep.subr.mxu0 0.0
        %569 = vmatpush1.msra.mxu0 0.0
        %570 = vmatprep.subr.mxu0 0.0
        %571 = vmatpush1.msra.mxu0 0.0
        %572 = vmatprep.subr.mxu0 0.0
        %573 = vmatpush1.msra.mxu0 0.0
        %574 = vmatprep.subr.mxu0 0.0
        %575 = vmatpush1.msra.mxu0 0.0
        %576 = vmatprep.subr.mxu0 0.0
        %577 = vmatpush1.msra.mxu0 0.0
        %578 = vmatprep.subr.mxu0 0.0
        %579 = vmatpush1.msra.mxu0 0.0
        %580 = vmatprep.subr.mxu0 0.0
        %581 = vmatpush1.msra.mxu0 0.0
        %582 = vmatprep.subr.mxu0 0.0
        %583 = vmatpush1.msra.mxu0 0.0
        %584 = vmatprep.subr.mxu0 0.0
        %585 = vmatpush1.msra.mxu0 0.0
        %586 = vmatprep.subr.mxu0 0.0
        %587 = vmatpush1.msra.mxu0 0.0
        %588 = vmatprep.subr.mxu0 0.0
        %589 = vmatpush1.msra.mxu0 0.0
        %590 = vmatprep.subr.mxu0 0.0
        %591 = vmatpush1.msra.mxu0 0.0
        %592 = vmatprep.subr.mxu0 0.0
        %593 = vmatpush1.msra.mxu0 0.0
        %594 = vmatprep.subr.mxu0 0.0
        %595 = vmatpush1.msra.mxu0 0.0
        %596 = vmatprep.subr.mxu0 0.0
        %597 = vmatpush1.msra.mxu0 0.0
        %598 = vmatprep.subr.mxu0 0.0
        %599 = vmatpush1.msra.mxu0 0.0
        %600 = vmatprep.subr.mxu0 0.0
        %601 = vmatpush1.msra.mxu0 0.0
        %602 = vmatprep.subr.mxu0 0.0
        %603 = vmatpush1.msra.mxu0 0.0
        %604 = vmatprep.subr.mxu0 0.0
        %605 = vmatpush1.msra.mxu0 0.0
        %606 = vmatprep.subr.mxu0 0.0
        %607 = vmatpush1.msra.mxu0 0.0
        %608 = vmatprep.subr.mxu0 0.0
        %609 = vmatpush1.msra.mxu0 0.0
        %610 = vmatprep.subr.mxu0 0.0
        %611 = vmatpush1.msra.mxu0 0.0
        %612 = vmatprep.subr.mxu0 0.0
        %613 = vmatpush1.msra.mxu0 0.0
        %614 = vmatprep.subr.mxu0 0.0
        %615 = vmatpush1.msra.mxu0 0.0
        %616 = vmatprep.subr.mxu0 0.0
        %617 = vmatpush1.msra.mxu0 0.0
        %618 = vmatprep.subr.mxu0 0.0
        %619 = vmatpush1.msra.mxu0 0.0
        %620 = vmatprep.subr.mxu0 0.0
        %621 = vmatpush1.msra.mxu0 0.0
        %622 = vmatprep.subr.mxu0 0.0
        %623 = vmatpush1.msra.mxu0 0.0
        %624 = vmatprep.mubr.f32.mxu0 0.0
        %v625 = vand.u32 %v243, 4294901760
        %626 = vmatmul.mubr.f32.gmra.mrb[0].mxu0 %v625
        %v627 = vpop.f32.mrb[0].mxu0
        %v628 = vadd.f32 %v551, %v627
        %v629 = vpop.f32.mrb[0].mxu0
        %630 = vdwg.mxu0
        %631 = vmatprep.subr.mxu0 0.0
        %v632 = vand.u32 %v239, 4294901760
        %633 = vmatpush1.msra.mxu0 %v632
        %634 = vmatprep.subr.mxu0 0.0
        %v635 = vand.u32 %v240, 4294901760
        %636 = vmatpush1.msra.mxu0 %v635
        %637 = vmatprep.subr.mxu0 0.0
        %638 = vmatpush1.msra.mxu0 0.0
        %639 = vmatprep.subr.mxu0 0.0
        %640 = vmatpush1.msra.mxu0 0.0
        %641 = vmatprep.subr.mxu0 0.0
        %642 = vmatpush1.msra.mxu0 0.0
        %643 = vmatprep.subr.mxu0 0.0
        %644 = vmatpush1.msra.mxu0 0.0
        %645 = vmatprep.subr.mxu0 0.0
        %646 = vmatpush1.msra.mxu0 0.0
        %647 = vmatprep.subr.mxu0 0.0
        %648 = vmatpush1.msra.mxu0 0.0
        %649 = vmatprep.subr.mxu0 0.0
        %650 = vmatpush1.msra.mxu0 0.0
        %651 = vmatprep.subr.mxu0 0.0
        %652 = vmatpush1.msra.mxu0 0.0
        %653 = vmatprep.subr.mxu0 0.0
        %654 = vmatpush1.msra.mxu0 0.0
        %655 = vmatprep.subr.mxu0 0.0
        %656 = vmatpush1.msra.mxu0 0.0
        %657 = vmatprep.subr.mxu0 0.0
        %658 = vmatpush1.msra.mxu0 0.0
        %659 = vmatprep.subr.mxu0 0.0
        %660 = vmatpush1.msra.mxu0 0.0
        %661 = vmatprep.subr.mxu0 0.0
        %662 = vmatpush1.msra.mxu0 0.0
        %663 = vmatprep.subr.mxu0 0.0
        %664 = vmatpush1.msra.mxu0 0.0
        %665 = vmatprep.subr.mxu0 0.0
        %666 = vmatpush1.msra.mxu0 0.0
        %667 = vmatprep.subr.mxu0 0.0
        %668 = vmatpush1.msra.mxu0 0.0
        %669 = vmatprep.subr.mxu0 0.0
        %670 = vmatpush1.msra.mxu0 0.0
        %671 = vmatprep.subr.mxu0 0.0
        %672 = vmatpush1.msra.mxu0 0.0
        %673 = vmatprep.subr.mxu0 0.0
        %674 = vmatpush1.msra.mxu0 0.0
        %675 = vmatprep.subr.mxu0 0.0
        %676 = vmatpush1.msra.mxu0 0.0
        %677 = vmatprep.subr.mxu0 0.0
        %678 = vmatpush1.msra.mxu0 0.0
        %679 = vmatprep.subr.mxu0 0.0
        %680 = vmatpush1.msra.mxu0 0.0
        %681 = vmatprep.subr.mxu0 0.0
        %682 = vmatpush1.msra.mxu0 0.0
        %683 = vmatprep.subr.mxu0 0.0
        %684 = vmatpush1.msra.mxu0 0.0
        %685 = vmatprep.subr.mxu0 0.0
        %686 = vmatpush1.msra.mxu0 0.0
        %687 = vmatprep.subr.mxu0 0.0
        %688 = vmatpush1.msra.mxu0 0.0
        %689 = vmatprep.subr.mxu0 0.0
        %690 = vmatpush1.msra.mxu0 0.0
        %691 = vmatprep.subr.mxu0 0.0
        %692 = vmatpush1.msra.mxu0 0.0
        %693 = vmatprep.subr.mxu0 0.0
        %694 = vmatpush1.msra.mxu0 0.0
        %695 = vmatprep.subr.mxu0 0.0
        %696 = vmatpush1.msra.mxu0 0.0
        %697 = vmatprep.mubr.f32.mxu0 0.0
        %v698 = vand.u32 %v243, 4294901760
        %699 = vmatmul.mubr.f32.gmra.mrb[0].mxu0 %v698
        %v700 = vpop.f32.mrb[0].mxu0
        %v701 = vadd.f32 %v628, %v700
        %v702 = vpop.f32.mrb[0].mxu0
        %703 = vdwg.mxu0
        %v704 = vld [vmem:[%s237] sm:$0xf]
        %v705 = vld [vmem:[%s237 + $0x4] sm:$0xf]
        %v706 = vld [vmem:[%s237 + $0x8] sm:$0xf]
        %v707 = vld [vmem:[%s237 + $0xc] sm:$0xf]
        %s708 = scalar_lea.vmem %s237, 16
        %v709 = vld [vmem:[%s708] sm:$0xf]
        %v710 = vld [vmem:[%s708 + $0x4] sm:$0xf]
        %v711 = vld [vmem:[%s708 + $0x8] sm:$0xf]
        %v712 = vld [vmem:[%s708 + $0xc] sm:$0xf]
        %v713 = vsub.f32 %v709, %v704
        %v714 = vsub.f32 %v710, %v705
        %v715 = vsub.f32 %v711, %v706
        %v716 = vsub.f32 %v712, %v707
        %v717 = vadd.f32 %v704, %v709
        %v718 = vadd.f32 %v705, %v710
        %v719 = vadd.f32 %v706, %v711
        %v720 = vadd.f32 %v707, %v712
        %722 = vrot.lane.b32.xlu0 %v701, 124
        %v723 = vpop.permute.xlu0 %722
        %v725 = vadd.f32 %v701, %v723
        %v728 = vunpack.c.l.s4 1966171168
        %v729 = vunpack.c.0.s8 %v728
        %v730 = vlaneseq
        %v731 = vshrl.u32 %v730, 7
        %v732 = vsub.s32 %v729, %v731
        %v733 = vrot.slane %v725, %v732
        %v734 = vcombine.high %v733, %v733
        %v736 = vunpack.c.l.s4 1966171168
        %v737 = vunpack.c.0.s8 %v736
        %v738 = vlaneseq
        %v739 = vshrl.u32 %v738, 7
        %v740 = vsub.s32 %v737, %v739
        %v741 = vrot.slane %v733, %v740
        %v743 = vunpack.c.l.s4 1966171168
        %v744 = vunpack.c.0.s8 %v743
        %v745 = vlaneseq
        %v746 = vshrl.u32 %v745, 7
        %v747 = vsub.s32 %v744, %v746
        %v748 = vrot.slane %v734, %v747
        %v749 = vcombine.high %v741, %v741
        %v750 = vcombine.high %v748, %v748
        %v751 = vlaneseq
        %v752 = vshrl.u32 %v751, 7
        %v753 = vsub.s32 0, %v752
        %v754 = vrot.slane %v741, %v753
        %v755 = vlaneseq
        %v756 = vshrl.u32 %v755, 7
        %v757 = vsub.s32 0, %v756
        %v758 = vrot.slane %v748, %v757
        %v759 = vlaneseq
        %v760 = vshrl.u32 %v759, 7
        %v761 = vsub.s32 0, %v760
        %v762 = vrot.slane %v749, %v761
        %v763 = vlaneseq
        %v764 = vshrl.u32 %v763, 7
        %v765 = vsub.s32 0, %v764
        %v766 = vrot.slane %v750, %v765
        %v771 = vmul.f32 %v704, %v754
        %v772 = vmul.f32 %v705, %v758
        %v773 = vmul.f32 %v706, %v762
        %v774 = vmul.f32 %v707, %v766
        %v776 = vunpack.c.l.s4 1966171168
        %v777 = vunpack.c.0.s8 %v776
        %v778 = vlaneseq
        %v779 = vshrl.u32 %v778, 7
        %v780 = vsub.s32 %v777, %v779
        %v781 = vrot.slane %v701, %v780
        %v782 = vcombine.high %v781, %v781
        %v784 = vunpack.c.l.s4 1966171168
        %v785 = vunpack.c.0.s8 %v784
        %v786 = vlaneseq
        %v787 = vshrl.u32 %v786, 7
        %v788 = vsub.s32 %v785, %v787
        %v789 = vrot.slane %v781, %v788
        %v791 = vunpack.c.l.s4 1966171168
        %v792 = vunpack.c.0.s8 %v791
        %v793 = vlaneseq
        %v794 = vshrl.u32 %v793, 7
        %v795 = vsub.s32 %v792, %v794
        %v796 = vrot.slane %v782, %v795
        %v797 = vcombine.high %v789, %v789
        %v798 = vcombine.high %v796, %v796
        %v799 = vlaneseq
        %v800 = vshrl.u32 %v799, 7
        %v801 = vsub.s32 0, %v800
        %v802 = vrot.slane %v789, %v801
        %v803 = vlaneseq
        %v804 = vshrl.u32 %v803, 7
        %v805 = vsub.s32 0, %v804
        %v806 = vrot.slane %v796, %v805
        %v807 = vlaneseq
        %v808 = vshrl.u32 %v807, 7
        %v809 = vsub.s32 0, %v808
        %v810 = vrot.slane %v797, %v809
        %v811 = vlaneseq
        %v812 = vshrl.u32 %v811, 7
        %v813 = vsub.s32 0, %v812
        %v814 = vrot.slane %v798, %v813
        %v819 = vmul.f32 %v713, %v802
        %v820 = vmul.f32 %v714, %v806
        %v821 = vmul.f32 %v715, %v810
        %v822 = vmul.f32 %v716, %v814
        %823 = vrot.lane.b32.xlu0 %v802, 124
        %v824 = vpop.permute.xlu0 %823
        %825 = vrot.lane.b32.xlu0 %v806, 124
        %v826 = vpop.permute.xlu0 %825
        %827 = vrot.lane.b32.xlu0 %v810, 124
        %v828 = vpop.permute.xlu0 %827
        %829 = vrot.lane.b32.xlu0 %v814, 124
        %v830 = vpop.permute.xlu0 %829
        %v835 = vmul.f32 %v717, %v824
        %v836 = vmul.f32 %v718, %v826
        %v837 = vmul.f32 %v719, %v828
        %v838 = vmul.f32 %v720, %v830
        %v839 = vsub.f32 %v771, %v835
        %v840 = vsub.f32 %v772, %v836
        %v841 = vsub.f32 %v773, %v837
        %v842 = vsub.f32 %v774, %v838
        %vm843 = vcmask 27648
        %v844 = vsel %vm843, %v839, 0.0
        %v845 = vsel %vm843, %v840, 0.0
        %v846 = vadd.f32 %v844, %v845
        %v847 = vsel %vm843, %v841, 0.0
        %v848 = vadd.f32 %v846, %v847
        %v849 = vsel %vm843, %v842, 0.0
        %v850 = vadd.f32 %v848, %v849
        %851 = vst.msk [vmem:[#allocation2] sm:$0xf] %vm843, %v850
        %v852 = vadd.f32 %v771, %v819
        %v853 = vadd.f32 %v772, %v820
        %v854 = vadd.f32 %v773, %v821
        %v855 = vadd.f32 %v774, %v822
        %v856 = vsel %vm843, %v852, 0.0
        %v857 = vsel %vm843, %v853, 0.0
        %v858 = vadd.f32 %v856, %v857
        %v859 = vsel %vm843, %v854, 0.0
        %v860 = vadd.f32 %v858, %v859
        %v861 = vsel %vm843, %v855, 0.0
        %v862 = vadd.f32 %v860, %v861
        %864 = vrot.lane.b32.xlu0 %v862, 4
        %v865 = vpop.permute.xlu0 %864
        %vm867 = vcmask 60448
        %868 = vst.msk [vmem:[#allocation2] sm:$0xf] %vm867, %v865
        %v869 = vcombine.high %v725, %v725
        %v871 = vunpack.c.l.s4 1966171168
        %v872 = vunpack.c.0.s8 %v871
        %v873 = vlaneseq
        %v874 = vshrl.u32 %v873, 7
        %v875 = vsub.s32 %v872, %v874
        %v876 = vrot.slane %v869, %v875
        %v877 = vcombine.high %v876, %v876
        %v879 = vunpack.c.l.s4 1966171168
        %v880 = vunpack.c.0.s8 %v879
        %v881 = vlaneseq
        %v882 = vshrl.u32 %v881, 7
        %v883 = vsub.s32 %v880, %v882
        %v884 = vrot.slane %v876, %v883
        %v886 = vunpack.c.l.s4 1966171168
        %v887 = vunpack.c.0.s8 %v886
        %v888 = vlaneseq
        %v889 = vshrl.u32 %v888, 7
        %v890 = vsub.s32 %v887, %v889
        %v891 = vrot.slane %v877, %v890
        %v892 = vcombine.high %v884, %v884
        %v893 = vcombine.high %v891, %v891
        %v894 = vlaneseq
        %v895 = vshrl.u32 %v894, 7
        %v896 = vsub.s32 0, %v895
        %v897 = vrot.slane %v884, %v896
        %v898 = vlaneseq
        %v899 = vshrl.u32 %v898, 7
        %v900 = vsub.s32 0, %v899
        %v901 = vrot.slane %v891, %v900
        %v902 = vlaneseq
        %v903 = vshrl.u32 %v902, 7
        %v904 = vsub.s32 0, %v903
        %v905 = vrot.slane %v892, %v904
        %v906 = vlaneseq
        %v907 = vshrl.u32 %v906, 7
        %v908 = vsub.s32 0, %v907
        %v909 = vrot.slane %v893, %v908
        %v914 = vmul.f32 %v704, %v897
        %v915 = vmul.f32 %v705, %v901
        %v916 = vmul.f32 %v706, %v905
        %v917 = vmul.f32 %v707, %v909
        %v918 = vcombine.high %v701, %v701
        %v920 = vunpack.c.l.s4 1966171168
        %v921 = vunpack.c.0.s8 %v920
        %v922 = vlaneseq
        %v923 = vshrl.u32 %v922, 7
        %v924 = vsub.s32 %v921, %v923
        %v925 = vrot.slane %v918, %v924
        %v926 = vcombine.high %v925, %v925
        %v928 = vunpack.c.l.s4 1966171168
        %v929 = vunpack.c.0.s8 %v928
        %v930 = vlaneseq
        %v931 = vshrl.u32 %v930, 7
        %v932 = vsub.s32 %v929, %v931
        %v933 = vrot.slane %v925, %v932
        %v935 = vunpack.c.l.s4 1966171168
        %v936 = vunpack.c.0.s8 %v935
        %v937 = vlaneseq
        %v938 = vshrl.u32 %v937, 7
        %v939 = vsub.s32 %v936, %v938
        %v940 = vrot.slane %v926, %v939
        %v941 = vcombine.high %v933, %v933
        %v942 = vcombine.high %v940, %v940
        %v943 = vlaneseq
        %v944 = vshrl.u32 %v943, 7
        %v945 = vsub.s32 0, %v944
        %v946 = vrot.slane %v933, %v945
        %v947 = vlaneseq
        %v948 = vshrl.u32 %v947, 7
        %v949 = vsub.s32 0, %v948
        %v950 = vrot.slane %v940, %v949
        %v951 = vlaneseq
        %v952 = vshrl.u32 %v951, 7
        %v953 = vsub.s32 0, %v952
        %v954 = vrot.slane %v941, %v953
        %v955 = vlaneseq
        %v956 = vshrl.u32 %v955, 7
        %v957 = vsub.s32 0, %v956
        %v958 = vrot.slane %v942, %v957
        %v963 = vmul.f32 %v713, %v946
        %v964 = vmul.f32 %v714, %v950
        %v965 = vmul.f32 %v715, %v954
        %v966 = vmul.f32 %v716, %v958
        %967 = vrot.lane.b32.xlu0 %v946, 124
        %v968 = vpop.permute.xlu0 %967
        %969 = vrot.lane.b32.xlu0 %v950, 124
        %v970 = vpop.permute.xlu0 %969
        %971 = vrot.lane.b32.xlu0 %v954, 124
        %v972 = vpop.permute.xlu0 %971
        %973 = vrot.lane.b32.xlu0 %v958, 124
        %v974 = vpop.permute.xlu0 %973
        %v979 = vmul.f32 %v717, %v968
        %v980 = vmul.f32 %v718, %v970
        %v981 = vmul.f32 %v719, %v972
        %v982 = vmul.f32 %v720, %v974
        %v983 = vsub.f32 %v914, %v979
        %v984 = vsub.f32 %v915, %v980
        %v985 = vsub.f32 %v916, %v981
        %v986 = vsub.f32 %v917, %v982
        %v987 = vsel %vm843, %v983, 0.0
        %v988 = vsel %vm843, %v984, 0.0
        %v989 = vadd.f32 %v987, %v988
        %v990 = vsel %vm843, %v985, 0.0
        %v991 = vadd.f32 %v989, %v990
        %v992 = vsel %vm843, %v986, 0.0
        %v993 = vadd.f32 %v991, %v992
        %994 = vst.msk [vmem:[#allocation2 + $0x4] sm:$0xf] %vm843, %v993
        %v995 = vadd.f32 %v914, %v963
        %v996 = vadd.f32 %v915, %v964
        %v997 = vadd.f32 %v916, %v965
        %v998 = vadd.f32 %v917, %v966
        %v999 = vsel %vm843, %v995, 0.0
        %v1000 = vsel %vm843, %v996, 0.0
        %v1001 = vadd.f32 %v999, %v1000
        %v1002 = vsel %vm843, %v997, 0.0
        %v1003 = vadd.f32 %v1001, %v1002
        %v1004 = vsel %vm843, %v998, 0.0
        %v1005 = vadd.f32 %v1003, %v1004
        %1007 = vrot.lane.b32.xlu0 %v1005, 4
        %v1008 = vpop.permute.xlu0 %1007
        %1010 = vst.msk [vmem:[#allocation2 + $0x4] sm:$0xf] %vm867, %v1008
        %v1011 = vld [vmem:[#allocation2] sm:$0xff]
        %v1012 = vld [vmem:[%s3] sm:$0xff]
        %vm1013 = vcmask 64512
        %v1015 = vsel %vm1013, %v1011, 0
        %1017 = vmatprep.subr.mxu0 0.0
        %v1018 = vand.u32 %v1012, 4294901760
        %1019 = vmatpush1.msra.mxu0 %v1018
        %1020 = vmatprep.subr.mxu0 0.0
        %1021 = vmatpush1.msra.mxu0 0.0
        %1022 = vmatprep.subr.mxu0 0.0
        %1023 = vmatpush1.msra.mxu0 0.0
        %1024 = vmatprep.subr.mxu0 0.0
        %1025 = vmatpush1.msra.mxu0 0.0
        %1026 = vmatprep.subr.mxu0 0.0
        %1027 = vmatpush1.msra.mxu0 0.0
        %1028 = vmatprep.subr.mxu0 0.0
        %1029 = vmatpush1.msra.mxu0 0.0
        %1030 = vmatprep.subr.mxu0 0.0
        %1031 = vmatpush1.msra.mxu0 0.0
        %1032 = vmatprep.subr.mxu0 0.0
        %1033 = vmatpush1.msra.mxu0 0.0
        %1034 = vmatprep.subr.mxu0 0.0
        %1035 = vmatpush1.msra.mxu0 0.0
        %1036 = vmatprep.subr.mxu0 0.0
        %1037 = vmatpush1.msra.mxu0 0.0
        %1038 = vmatprep.subr.mxu0 0.0
        %1039 = vmatpush1.msra.mxu0 0.0
        %1040 = vmatprep.subr.mxu0 0.0
        %1041 = vmatpush1.msra.mxu0 0.0
        %1042 = vmatprep.subr.mxu0 0.0
        %1043 = vmatpush1.msra.mxu0 0.0
        %1044 = vmatprep.subr.mxu0 0.0
        %1045 = vmatpush1.msra.mxu0 0.0
        %1046 = vmatprep.subr.mxu0 0.0
        %1047 = vmatpush1.msra.mxu0 0.0
        %1048 = vmatprep.subr.mxu0 0.0
        %1049 = vmatpush1.msra.mxu0 0.0
        %1050 = vmatprep.subr.mxu0 0.0
        %1051 = vmatpush1.msra.mxu0 0.0
        %1052 = vmatprep.subr.mxu0 0.0
        %1053 = vmatpush1.msra.mxu0 0.0
        %1054 = vmatprep.subr.mxu0 0.0
        %1055 = vmatpush1.msra.mxu0 0.0
        %1056 = vmatprep.subr.mxu0 0.0
        %1057 = vmatpush1.msra.mxu0 0.0
        %1058 = vmatprep.subr.mxu0 0.0
        %1059 = vmatpush1.msra.mxu0 0.0
        %1060 = vmatprep.subr.mxu0 0.0
        %1061 = vmatpush1.msra.mxu0 0.0
        %1062 = vmatprep.subr.mxu0 0.0
        %1063 = vmatpush1.msra.mxu0 0.0
        %1064 = vmatprep.subr.mxu0 0.0
        %1065 = vmatpush1.msra.mxu0 0.0
        %1066 = vmatprep.subr.mxu0 0.0
        %1067 = vmatpush1.msra.mxu0 0.0
        %1068 = vmatprep.subr.mxu0 0.0
        %1069 = vmatpush1.msra.mxu0 0.0
        %1070 = vmatprep.subr.mxu0 0.0
        %1071 = vmatpush1.msra.mxu0 0.0
        %1072 = vmatprep.subr.mxu0 0.0
        %1073 = vmatpush1.msra.mxu0 0.0
        %1074 = vmatprep.subr.mxu0 0.0
        %1075 = vmatpush1.msra.mxu0 0.0
        %1076 = vmatprep.subr.mxu0 0.0
        %1077 = vmatpush1.msra.mxu0 0.0
        %1078 = vmatprep.subr.mxu0 0.0
        %1079 = vmatpush1.msra.mxu0 0.0
        %1080 = vmatprep.subr.mxu0 0.0
        %1081 = vmatpush1.msra.mxu0 0.0
        %1082 = vmatprep.mubr.f32.mxu0 0.0
        %v1083 = vand.u32 %v1015, 4294901760
        %v1084 = vsub.f32 %v1015, %v1083
        %v1085 = vand.u32 %v1084, 4294901760
        %v1086 = vsub.f32 %v1084, %v1085
        %v1087 = vand.u32 %v1086, 4294901760
        %1088 = vmatmul.mubr.f32.gmra.mrb[0].mxu0 %v1087
        %v1089 = vpop.f32.mrb[0].mxu0
        %v1090 = vadd.f32 0.0, %v1089
        %v1091 = vpop.f32.mrb[0].mxu0
        %1092 = vdwg.mxu0
        %1093 = vmatprep.subr.mxu0 0.0
        %v1094 = vand.u32 %v1012, 4294901760
        %v1095 = vsub.f32 %v1012, %v1094
        %v1096 = vand.u32 %v1095, 4294901760
        %v1097 = vsub.f32 %v1095, %v1096
        %v1098 = vand.u32 %v1097, 4294901760
        %1099 = vmatpush1.msra.mxu0 %v1098
        %1100 = vmatprep.subr.mxu0 0.0
        %1101 = vmatpush1.msra.mxu0 0.0
        %1102 = vmatprep.subr.mxu0 0.0
        %1103 = vmatpush1.msra.mxu0 0.0
        %1104 = vmatprep.subr.mxu0 0.0
        %1105 = vmatpush1.msra.mxu0 0.0
        %1106 = vmatprep.subr.mxu0 0.0
        %1107 = vmatpush1.msra.mxu0 0.0
        %1108 = vmatprep.subr.mxu0 0.0
        %1109 = vmatpush1.msra.mxu0 0.0
        %1110 = vmatprep.subr.mxu0 0.0
        %1111 = vmatpush1.msra.mxu0 0.0
        %1112 = vmatprep.subr.mxu0 0.0
        %1113 = vmatpush1.msra.mxu0 0.0
        %1114 = vmatprep.subr.mxu0 0.0
        %1115 = vmatpush1.msra.mxu0 0.0
        %1116 = vmatprep.subr.mxu0 0.0
        %1117 = vmatpush1.msra.mxu0 0.0
        %1118 = vmatprep.subr.mxu0 0.0
        %1119 = vmatpush1.msra.mxu0 0.0
        %1120 = vmatprep.subr.mxu0 0.0
        %1121 = vmatpush1.msra.mxu0 0.0
        %1122 = vmatprep.subr.mxu0 0.0
        %1123 = vmatpush1.msra.mxu0 0.0
        %1124 = vmatprep.subr.mxu0 0.0
        %1125 = vmatpush1.msra.mxu0 0.0
        %1126 = vmatprep.subr.mxu0 0.0
        %1127 = vmatpush1.msra.mxu0 0.0
        %1128 = vmatprep.subr.mxu0 0.0
        %1129 = vmatpush1.msra.mxu0 0.0
        %1130 = vmatprep.subr.mxu0 0.0
        %1131 = vmatpush1.msra.mxu0 0.0
        %1132 = vmatprep.subr.mxu0 0.0
        %1133 = vmatpush1.msra.mxu0 0.0
        %1134 = vmatprep.subr.mxu0 0.0
        %1135 = vmatpush1.msra.mxu0 0.0
        %1136 = vmatprep.subr.mxu0 0.0
        %1137 = vmatpush1.msra.mxu0 0.0
        %1138 = vmatprep.subr.mxu0 0.0
        %1139 = vmatpush1.msra.mxu0 0.0
        %1140 = vmatprep.subr.mxu0 0.0
        %1141 = vmatpush1.msra.mxu0 0.0
        %1142 = vmatprep.subr.mxu0 0.0
        %1143 = vmatpush1.msra.mxu0 0.0
        %1144 = vmatprep.subr.mxu0 0.0
        %1145 = vmatpush1.msra.mxu0 0.0
        %1146 = vmatprep.subr.mxu0 0.0
        %1147 = vmatpush1.msra.mxu0 0.0
        %1148 = vmatprep.subr.mxu0 0.0
        %1149 = vmatpush1.msra.mxu0 0.0
        %1150 = vmatprep.subr.mxu0 0.0
        %1151 = vmatpush1.msra.mxu0 0.0
        %1152 = vmatprep.subr.mxu0 0.0
        %1153 = vmatpush1.msra.mxu0 0.0
        %1154 = vmatprep.subr.mxu0 0.0
        %1155 = vmatpush1.msra.mxu0 0.0
        %1156 = vmatprep.subr.mxu0 0.0
        %1157 = vmatpush1.msra.mxu0 0.0
        %1158 = vmatprep.subr.mxu0 0.0
        %1159 = vmatpush1.msra.mxu0 0.0
        %1160 = vmatprep.subr.mxu0 0.0
        %1161 = vmatpush1.msra.mxu0 0.0
        %1162 = vmatprep.mubr.f32.mxu0 0.0
        %v1163 = vand.u32 %v1015, 4294901760
        %1164 = vmatmul.mubr.f32.gmra.mrb[0].mxu0 %v1163
        %v1165 = vpop.f32.mrb[0].mxu0
        %v1166 = vadd.f32 %v1090, %v1165
        %v1167 = vpop.f32.mrb[0].mxu0
        %1168 = vdwg.mxu0
        %1169 = vmatprep.subr.mxu0 0.0
        %v1170 = vand.u32 %v1012, 4294901760
        %v1171 = vsub.f32 %v1012, %v1170
        %1172 = vmatpush1.msra.mxu0 %v1171
        %1173 = vmatprep.subr.mxu0 0.0
        %1174 = vmatpush1.msra.mxu0 0.0
        %1175 = vmatprep.subr.mxu0 0.0
        %1176 = vmatpush1.msra.mxu0 0.0
        %1177 = vmatprep.subr.mxu0 0.0
        %1178 = vmatpush1.msra.mxu0 0.0
        %1179 = vmatprep.subr.mxu0 0.0
        %1180 = vmatpush1.msra.mxu0 0.0
        %1181 = vmatprep.subr.mxu0 0.0
        %1182 = vmatpush1.msra.mxu0 0.0
        %1183 = vmatprep.subr.mxu0 0.0
        %1184 = vmatpush1.msra.mxu0 0.0
        %1185 = vmatprep.subr.mxu0 0.0
        %1186 = vmatpush1.msra.mxu0 0.0
        %1187 = vmatprep.subr.mxu0 0.0
        %1188 = vmatpush1.msra.mxu0 0.0
        %1189 = vmatprep.subr.mxu0 0.0
        %1190 = vmatpush1.msra.mxu0 0.0
        %1191 = vmatprep.subr.mxu0 0.0
        %1192 = vmatpush1.msra.mxu0 0.0
        %1193 = vmatprep.subr.mxu0 0.0
        %1194 = vmatpush1.msra.mxu0 0.0
        %1195 = vmatprep.subr.mxu0 0.0
        %1196 = vmatpush1.msra.mxu0 0.0
        %1197 = vmatprep.subr.mxu0 0.0
        %1198 = vmatpush1.msra.mxu0 0.0
        %1199 = vmatprep.subr.mxu0 0.0
        %1200 = vmatpush1.msra.mxu0 0.0
        %1201 = vmatprep.subr.mxu0 0.0
        %1202 = vmatpush1.msra.mxu0 0.0
        %1203 = vmatprep.subr.mxu0 0.0
        %1204 = vmatpush1.msra.mxu0 0.0
        %1205 = vmatprep.subr.mxu0 0.0
        %1206 = vmatpush1.msra.mxu0 0.0
        %1207 = vmatprep.subr.mxu0 0.0
        %1208 = vmatpush1.msra.mxu0 0.0
        %1209 = vmatprep.subr.mxu0 0.0
        %1210 = vmatpush1.msra.mxu0 0.0
        %1211 = vmatprep.subr.mxu0 0.0
        %1212 = vmatpush1.msra.mxu0 0.0
        %1213 = vmatprep.subr.mxu0 0.0
        %1214 = vmatpush1.msra.mxu0 0.0
        %1215 = vmatprep.subr.mxu0 0.0
        %1216 = vmatpush1.msra.mxu0 0.0
        %1217 = vmatprep.subr.mxu0 0.0
        %1218 = vmatpush1.msra.mxu0 0.0
        %1219 = vmatprep.subr.mxu0 0.0
        %1220 = vmatpush1.msra.mxu0 0.0
        %1221 = vmatprep.subr.mxu0 0.0
        %1222 = vmatpush1.msra.mxu0 0.0
        %1223 = vmatprep.subr.mxu0 0.0
        %1224 = vmatpush1.msra.mxu0 0.0
        %1225 = vmatprep.subr.mxu0 0.0
        %1226 = vmatpush1.msra.mxu0 0.0
        %1227 = vmatprep.subr.mxu0 0.0
        %1228 = vmatpush1.msra.mxu0 0.0
        %1229 = vmatprep.subr.mxu0 0.0
        %1230 = vmatpush1.msra.mxu0 0.0
        %1231 = vmatprep.subr.mxu0 0.0
        %1232 = vmatpush1.msra.mxu0 0.0
        %1233 = vmatprep.subr.mxu0 0.0
        %1234 = vmatpush1.msra.mxu0 0.0
        %1235 = vmatprep.mubr.f32.mxu0 0.0
        %v1236 = vand.u32 %v1015, 4294901760
        %v1237 = vsub.f32 %v1015, %v1236
        %1238 = vmatmul.mubr.f32.gmra.mrb[0].mxu0 %v1237
        %v1239 = vpop.f32.mrb[0].mxu0
        %v1240 = vadd.f32 %v1166, %v1239
        %v1241 = vpop.f32.mrb[0].mxu0
        %1242 = vdwg.mxu0
        %1243 = vmatprep.subr.mxu0 0.0
        %v1244 = vand.u32 %v1012, 4294901760
        %1245 = vmatpush1.msra.mxu0 %v1244
        %1246 = vmatprep.subr.mxu0 0.0
        %1247 = vmatpush1.msra.mxu0 0.0
        %1248 = vmatprep.subr.mxu0 0.0
        %1249 = vmatpush1.msra.mxu0 0.0
        %1250 = vmatprep.subr.mxu0 0.0
        %1251 = vmatpush1.msra.mxu0 0.0
        %1252 = vmatprep.subr.mxu0 0.0
        %1253 = vmatpush1.msra.mxu0 0.0
        %1254 = vmatprep.subr.mxu0 0.0
        %1255 = vmatpush1.msra.mxu0 0.0
        %1256 = vmatprep.subr.mxu0 0.0
        %1257 = vmatpush1.msra.mxu0 0.0
        %1258 = vmatprep.subr.mxu0 0.0
        %1259 = vmatpush1.msra.mxu0 0.0
        %1260 = vmatprep.subr.mxu0 0.0
        %1261 = vmatpush1.msra.mxu0 0.0
        %1262 = vmatprep.subr.mxu0 0.0
        %1263 = vmatpush1.msra.mxu0 0.0
        %1264 = vmatprep.subr.mxu0 0.0
        %1265 = vmatpush1.msra.mxu0 0.0
        %1266 = vmatprep.subr.mxu0 0.0
        %1267 = vmatpush1.msra.mxu0 0.0
        %1268 = vmatprep.subr.mxu0 0.0
        %1269 = vmatpush1.msra.mxu0 0.0
        %1270 = vmatprep.subr.mxu0 0.0
        %1271 = vmatpush1.msra.mxu0 0.0
        %1272 = vmatprep.subr.mxu0 0.0
        %1273 = vmatpush1.msra.mxu0 0.0
        %1274 = vmatprep.subr.mxu0 0.0
        %1275 = vmatpush1.msra.mxu0 0.0
        %1276 = vmatprep.subr.mxu0 0.0
        %1277 = vmatpush1.msra.mxu0 0.0
        %1278 = vmatprep.subr.mxu0 0.0
        %1279 = vmatpush1.msra.mxu0 0.0
        %1280 = vmatprep.subr.mxu0 0.0
        %1281 = vmatpush1.msra.mxu0 0.0
        %1282 = vmatprep.subr.mxu0 0.0
        %1283 = vmatpush1.msra.mxu0 0.0
        %1284 = vmatprep.subr.mxu0 0.0
        %1285 = vmatpush1.msra.mxu0 0.0
        %1286 = vmatprep.subr.mxu0 0.0
        %1287 = vmatpush1.msra.mxu0 0.0
        %1288 = vmatprep.subr.mxu0 0.0
        %1289 = vmatpush1.msra.mxu0 0.0
        %1290 = vmatprep.subr.mxu0 0.0
        %1291 = vmatpush1.msra.mxu0 0.0
        %1292 = vmatprep.subr.mxu0 0.0
        %1293 = vmatpush1.msra.mxu0 0.0
        %1294 = vmatprep.subr.mxu0 0.0
        %1295 = vmatpush1.msra.mxu0 0.0
        %1296 = vmatprep.subr.mxu0 0.0
        %1297 = vmatpush1.msra.mxu0 0.0
        %1298 = vmatprep.subr.mxu0 0.0
        %1299 = vmatpush1.msra.mxu0 0.0
        %1300 = vmatprep.subr.mxu0 0.0
        %1301 = vmatpush1.msra.mxu0 0.0
        %1302 = vmatprep.subr.mxu0 0.0
        %1303 = vmatpush1.msra.mxu0 0.0
        %1304 = vmatprep.subr.mxu0 0.0
        %1305 = vmatpush1.msra.mxu0 0.0
        %1306 = vmatprep.subr.mxu0 0.0
        %1307 = vmatpush1.msra.mxu0 0.0
        %1308 = vmatprep.mubr.f32.mxu0 0.0
        %v1309 = vand.u32 %v1015, 4294901760
        %v1310 = vsub.f32 %v1015, %v1309
        %v1311 = vand.u32 %v1310, 4294901760
        %1312 = vmatmul.mubr.f32.gmra.mrb[0].mxu0 %v1311
        %v1313 = vpop.f32.mrb[0].mxu0
        %v1314 = vadd.f32 %v1240, %v1313
        %v1315 = vpop.f32.mrb[0].mxu0
        %1316 = vdwg.mxu0
        %1317 = vmatprep.subr.mxu0 0.0
        %v1318 = vand.u32 %v1012, 4294901760
        %v1319 = vsub.f32 %v1012, %v1318
        %v1320 = vand.u32 %v1319, 4294901760
        %1321 = vmatpush1.msra.mxu0 %v1320
        %1322 = vmatprep.subr.mxu0 0.0
        %1323 = vmatpush1.msra.mxu0 0.0
        %1324 = vmatprep.subr.mxu0 0.0
        %1325 = vmatpush1.msra.mxu0 0.0
        %1326 = vmatprep.subr.mxu0 0.0
        %1327 = vmatpush1.msra.mxu0 0.0
        %1328 = vmatprep.subr.mxu0 0.0
        %1329 = vmatpush1.msra.mxu0 0.0
        %1330 = vmatprep.subr.mxu0 0.0
        %1331 = vmatpush1.msra.mxu0 0.0
        %1332 = vmatprep.subr.mxu0 0.0
        %1333 = vmatpush1.msra.mxu0 0.0
        %1334 = vmatprep.subr.mxu0 0.0
        %1335 = vmatpush1.msra.mxu0 0.0
        %1336 = vmatprep.subr.mxu0 0.0
        %1337 = vmatpush1.msra.mxu0 0.0
        %1338 = vmatprep.subr.mxu0 0.0
        %1339 = vmatpush1.msra.mxu0 0.0
        %1340 = vmatprep.subr.mxu0 0.0
        %1341 = vmatpush1.msra.mxu0 0.0
        %1342 = vmatprep.subr.mxu0 0.0
        %1343 = vmatpush1.msra.mxu0 0.0
        %1344 = vmatprep.subr.mxu0 0.0
        %1345 = vmatpush1.msra.mxu0 0.0
        %1346 = vmatprep.subr.mxu0 0.0
        %1347 = vmatpush1.msra.mxu0 0.0
        %1348 = vmatprep.subr.mxu0 0.0
        %1349 = vmatpush1.msra.mxu0 0.0
        %1350 = vmatprep.subr.mxu0 0.0
        %1351 = vmatpush1.msra.mxu0 0.0
        %1352 = vmatprep.subr.mxu0 0.0
        %1353 = vmatpush1.msra.mxu0 0.0
        %1354 = vmatprep.subr.mxu0 0.0
        %1355 = vmatpush1.msra.mxu0 0.0
        %1356 = vmatprep.subr.mxu0 0.0
        %1357 = vmatpush1.msra.mxu0 0.0
        %1358 = vmatprep.subr.mxu0 0.0
        %1359 = vmatpush1.msra.mxu0 0.0
        %1360 = vmatprep.subr.mxu0 0.0
        %1361 = vmatpush1.msra.mxu0 0.0
        %1362 = vmatprep.subr.mxu0 0.0
        %1363 = vmatpush1.msra.mxu0 0.0
        %1364 = vmatprep.subr.mxu0 0.0
        %1365 = vmatpush1.msra.mxu0 0.0
        %1366 = vmatprep.subr.mxu0 0.0
        %1367 = vmatpush1.msra.mxu0 0.0
        %1368 = vmatprep.subr.mxu0 0.0
        %1369 = vmatpush1.msra.mxu0 0.0
        %1370 = vmatprep.subr.mxu0 0.0
        %1371 = vmatpush1.msra.mxu0 0.0
        %1372 = vmatprep.subr.mxu0 0.0
        %1373 = vmatpush1.msra.mxu0 0.0
        %1374 = vmatprep.subr.mxu0 0.0
        %1375 = vmatpush1.msra.mxu0 0.0
        %1376 = vmatprep.subr.mxu0 0.0
        %1377 = vmatpush1.msra.mxu0 0.0
        %1378 = vmatprep.subr.mxu0 0.0
        %1379 = vmatpush1.msra.mxu0 0.0
        %1380 = vmatprep.subr.mxu0 0.0
        %1381 = vmatpush1.msra.mxu0 0.0
        %1382 = vmatprep.subr.mxu0 0.0
        %1383 = vmatpush1.msra.mxu0 0.0
        %1384 = vmatprep.mubr.f32.mxu0 0.0
        %v1385 = vand.u32 %v1015, 4294901760
        %1386 = vmatmul.mubr.f32.gmra.mrb[0].mxu0 %v1385
        %v1387 = vpop.f32.mrb[0].mxu0
        %v1388 = vadd.f32 %v1314, %v1387
        %v1389 = vpop.f32.mrb[0].mxu0
        %1390 = vdwg.mxu0
        %1391 = vmatprep.subr.mxu0 0.0
        %v1392 = vand.u32 %v1012, 4294901760
        %1393 = vmatpush1.msra.mxu0 %v1392
        %1394 = vmatprep.subr.mxu0 0.0
        %1395 = vmatpush1.msra.mxu0 0.0
        %1396 = vmatprep.subr.mxu0 0.0
        %1397 = vmatpush1.msra.mxu0 0.0
        %1398 = vmatprep.subr.mxu0 0.0
        %1399 = vmatpush1.msra.mxu0 0.0
        %1400 = vmatprep.subr.mxu0 0.0
        %1401 = vmatpush1.msra.mxu0 0.0
        %1402 = vmatprep.subr.mxu0 0.0
        %1403 = vmatpush1.msra.mxu0 0.0
        %1404 = vmatprep.subr.mxu0 0.0
        %1405 = vmatpush1.msra.mxu0 0.0
        %1406 = vmatprep.subr.mxu0 0.0
        %1407 = vmatpush1.msra.mxu0 0.0
        %1408 = vmatprep.subr.mxu0 0.0
        %1409 = vmatpush1.msra.mxu0 0.0
        %1410 = vmatprep.subr.mxu0 0.0
        %1411 = vmatpush1.msra.mxu0 0.0
        %1412 = vmatprep.subr.mxu0 0.0
        %1413 = vmatpush1.msra.mxu0 0.0
        %1414 = vmatprep.subr.mxu0 0.0
        %1415 = vmatpush1.msra.mxu0 0.0
        %1416 = vmatprep.subr.mxu0 0.0
        %1417 = vmatpush1.msra.mxu0 0.0
        %1418 = vmatprep.subr.mxu0 0.0
        %1419 = vmatpush1.msra.mxu0 0.0
        %1420 = vmatprep.subr.mxu0 0.0
        %1421 = vmatpush1.msra.mxu0 0.0
        %1422 = vmatprep.subr.mxu0 0.0
        %1423 = vmatpush1.msra.mxu0 0.0
        %1424 = vmatprep.subr.mxu0 0.0
        %1425 = vmatpush1.msra.mxu0 0.0
        %1426 = vmatprep.subr.mxu0 0.0
        %1427 = vmatpush1.msra.mxu0 0.0
        %1428 = vmatprep.subr.mxu0 0.0
        %1429 = vmatpush1.msra.mxu0 0.0
        %1430 = vmatprep.subr.mxu0 0.0
        %1431 = vmatpush1.msra.mxu0 0.0
        %1432 = vmatprep.subr.mxu0 0.0
        %1433 = vmatpush1.msra.mxu0 0.0
        %1434 = vmatprep.subr.mxu0 0.0
        %1435 = vmatpush1.msra.mxu0 0.0
        %1436 = vmatprep.subr.mxu0 0.0
        %1437 = vmatpush1.msra.mxu0 0.0
        %1438 = vmatprep.subr.mxu0 0.0
        %1439 = vmatpush1.msra.mxu0 0.0
        %1440 = vmatprep.subr.mxu0 0.0
        %1441 = vmatpush1.msra.mxu0 0.0
        %1442 = vmatprep.subr.mxu0 0.0
        %1443 = vmatpush1.msra.mxu0 0.0
        %1444 = vmatprep.subr.mxu0 0.0
        %1445 = vmatpush1.msra.mxu0 0.0
        %1446 = vmatprep.subr.mxu0 0.0
        %1447 = vmatpush1.msra.mxu0 0.0
        %1448 = vmatprep.subr.mxu0 0.0
        %1449 = vmatpush1.msra.mxu0 0.0
        %1450 = vmatprep.subr.mxu0 0.0
        %1451 = vmatpush1.msra.mxu0 0.0
        %1452 = vmatprep.subr.mxu0 0.0
        %1453 = vmatpush1.msra.mxu0 0.0
        %1454 = vmatprep.subr.mxu0 0.0
        %1455 = vmatpush1.msra.mxu0 0.0
        %1456 = vmatprep.mubr.f32.mxu0 0.0
        %v1457 = vand.u32 %v1015, 4294901760
        %1458 = vmatmul.mubr.f32.gmra.mrb[0].mxu0 %v1457
        %v1459 = vpop.f32.mrb[0].mxu0
        %v1460 = vadd.f32 %v1388, %v1459
        %v1461 = vpop.f32.mrb[0].mxu0
        %1462 = vdwg.mxu0
        %1463 = vst [vmem:[%s225] sm:$0xff] %v1460
        %s1464 = sand.u32 %s136, 1
        %s1465 = scalar_lea.sflag [#allocation4], %s1464
        %s1466 = sand.u32 %s136, 1
        %s1467 = smul.addr %s1466, 8
        %s1468 = scalar_lea.vmem [#allocation3], %s1467
        // Predicated region
        $region37: #{tpu_custom_call.1} parent=35 // pred_check
          %p1469 = pneg %p146
        $region38: #{tpu_custom_call.1} parent=35 // pred_check_branch
          %1471 = sbr.rel (%p1469) target = $region40
        $region39: #{tpu_custom_call.1} parent=35 // pred_region
          %s1473 = ssub.s32 128, 128
          %1474 = vsyncadd %s1465, %s1473
          %s1475 = sadd.s32 %s23, %s22
          %s1476 = smul.addr %s1475, 128
          %s1477 = scalar_lea.hbm %s4, %s1476
          %s1479 = sshll.u32 %s1468, 4
          %s1480 = int_to_ptr.vmem [resolvable:$true] %s1479
          %1482 = dma.vmem_to_hbm [thread:$0]  %s1480, 128, %s1477, %s1465
        $region40: #{tpu_custom_call.1} parent=35 // pred_fallthru
          _
      $region36: #{tpu_custom_call.1} parent=5 // pred_fallthru
        _
      %p1483 = scmp.le.s32.totalorder 2, %s13
      // Predicated region
      $region41: #{tpu_custom_call.1} parent=5 // pred_check
        %p1484 = pneg %p1483
      $region42: #{tpu_custom_call.1} parent=5 // pred_check_branch
        %1486 = sbr.rel (%p1484) target = $region44
      $region43: #{tpu_custom_call.1} parent=5 // pred_region
        %s1487 = ssub.s32 %s13, 2
        // Predicated region
        $region45: #{tpu_custom_call.1} parent=43 // pred_check
          %p1488 = pneg %p152
        $region46: #{tpu_custom_call.1} parent=43 // pred_check_branch
          %1490 = sbr.rel (%p1488) target = $region48
        $region47: #{tpu_custom_call.1} parent=43 // pred_region
          %s1491 = sand.u32 %s137, 1
          %s1492 = scalar_lea.sflag [#allocation4], %s1491
          %s1493 = sand.u32 %s137, 1
          %s1494 = smul.addr %s1493, 8
          %s1495 = scalar_lea.vmem [#allocation3], %s1494
          %1496 = dma.done %s1492, 128
        $region48: #{tpu_custom_call.1} parent=43 // pred_fallthru
          _
      $region44: #{tpu_custom_call.1} parent=5 // pred_fallthru
        _
    $region6: #{tpu_custom_call.1} parent=1 // loop_footer
      %s17 = sadd.s32 1, %s13
    $region7: #{tpu_custom_call.1} parent=1 // loop_footer_branch
      %12 = sbr.rel target = $region3
    $region8: #{tpu_custom_call.1} parent=1 // loop_exit
      _
    %1497 = vsyncpa [#allocation4], 1
    %s1498 = scalar_lea.sflag [#allocation4], 1
    %1499 = vsyncpa %s1498, 1

</llo_original>
